<compile_context>
chip_gen: v6e
topology: v6e:2x2x1
jax: 0.10.0
libtpu: 0.0.40
codegen_flags: <defaults>
</compile_context>

<pallas_src>
import functools

import jax
import jax.numpy as jnp
from jax.experimental import pallas as pl
from jax.experimental.pallas import tpu as pltpu


def _round_up(x, m):
    return ((x + m - 1) // m) * m


def _convblock_kernel(x_ref, w_ref, b_ref, o_ref, *, tap_offsets, lout):
    # x_ref: (1, Cin, Lext)    zero-extended flattened padded image (compute dtype)
    # w_ref: (9, Coutp, Cin)   per-tap weights (compute dtype)
    # b_ref: (Coutp, 1)        f32 bias column
    # o_ref: (1, Coutp, Lout)  lane-dense output block (Lout % 128 == 0)
    x = x_ref[0]                                      # (Cin, Lext)
    coutp = o_ref.shape[1]

    acc = jnp.zeros((coutp, lout), jnp.float32)
    for t, off in enumerate(tap_offsets):             # 9 static taps
        # Static lane-offset slice of the VMEM block (lowers to lane shifts),
        # then one K=Cin MXU matmul accumulated in f32.
        acc = acc + jnp.dot(w_ref[t], x[:, off:off + lout],
                            preferred_element_type=jnp.float32)
    acc = acc + b_ref[...]                            # (Coutp, 1) broadcast add (VPU)

    # Mish(x) = x * tanh(softplus(x)) = x * (u^2 - 1) / (u^2 + 1), u = 1 + exp(x)
    u = 1.0 + jnp.exp(acc)                            # EUP exp
    u2 = u * u
    num = u2 - 1.0
    den = u2 + 1.0
    r = pl.reciprocal(den, approx=True)               # EUP slot (nearly free)
    if jnp.dtype(o_ref.dtype).itemsize >= 4:
        r = r * (2.0 - den * r)                       # one Newton step only for f32 out
    mish = acc * num * r
    # Guard large x: exp overflow -> inf/inf NaN in the discarded branch;
    # mish(x) == x to f32 precision for x > ~20.
    out = jnp.where(acc > 20.0, acc, mish)
    o_ref[0] = out.astype(o_ref.dtype)


def conv_block_mish(x_nchw, w_oihw, bias, *, compute_dtype=jnp.bfloat16):
    """ConvBlock forward: Conv2d(k=3, s=1, p=1, bias=True) + Mish.

    x_nchw: (N, Cin, H, W), w_oihw: (Cout, Cin, 3, 3), bias: (Cout,).
    Returns (N, Cout, H, W) in x's dtype.

    compute_dtype=bfloat16 (default) halves operand HBM/VMEM traffic and uses
    the full-rate MXU on v5e/v6e/v7x; accumulation and the Mish epilogue stay
    f32.  Expect ~1e-3-level absolute error vs a pure-f32 reference in that
    mode; pass compute_dtype=jnp.float32 for tight accuracy.
    """
    N, Cin, H, W = x_nchw.shape
    Cout = w_oihw.shape[0]
    Hp, Wp = H + 2, W + 2
    L = Hp * Wp                                   # padded-grid flat spatial size
    lout = _round_up(L, 128)                      # lane-dense output width
    max_off = 2 * Wp + 2                          # largest tap offset (kh=kw=2)
    lext = _round_up(max_off + lout, 128)         # zero-extended input width

    out_dtype = x_nchw.dtype
    coutp = _round_up(Cout, 8 if jnp.dtype(out_dtype).itemsize >= 4 else 16)

    # --- input prep (single consolidated chain: cast -> pad -> flatten -> extend) ---
    x_c = x_nchw.astype(compute_dtype)
    x_pad = jnp.pad(x_c, ((0, 0), (0, 0), (1, 1), (1, 1)))          # (N,Cin,Hp,Wp)
    x_flat = x_pad.reshape(N, Cin, L)
    x_ext = jnp.pad(x_flat, ((0, 0), (0, 0), (Wp + 1, lext - L - (Wp + 1))))

    # --- weights: (Cout,Cin,3,3) -> (9, Coutp, Cin); bias -> (Coutp, 1) f32 ---
    w_taps = jnp.transpose(w_oihw, (2, 3, 0, 1)).reshape(9, Cout, Cin)
    w_taps = jnp.pad(w_taps, ((0, 0), (0, coutp - Cout), (0, 0))).astype(compute_dtype)
    b_col = jnp.pad(bias, (0, coutp - Cout)).reshape(coutp, 1).astype(jnp.float32)

    # Tap (kh, kw) -> uniform flat lane offset on the zero-extended input.
    tap_offsets = tuple(kh * Wp + kw for kh in range(3) for kw in range(3))

    cdt = jnp.dtype(compute_dtype).itemsize
    odt = jnp.dtype(out_dtype).itemsize
    # VMEM footprint: double-buffered x / out blocks + resident weights, bias,
    # and the f32 accumulator value.
    vmem_est = (2 * (Cin * lext * cdt + coutp * lout * odt)
                + 9 * coutp * Cin * cdt + coutp * 4 + coutp * lout * 4)
    vmem_limit = int(min(max(2 * vmem_est, 16 * 1024 * 1024), 64 * 1024 * 1024))

    cost = pl.CostEstimate(
        flops=2 * N * coutp * 9 * Cin * lout,
        transcendentals=2 * N * coutp * lout,
        bytes_accessed=(N * Cin * lext * cdt + 9 * coutp * Cin * cdt
                        + coutp * 4 + N * coutp * lout * odt),
    )

    kernel = functools.partial(_convblock_kernel,
                               tap_offsets=tap_offsets, lout=lout)

    out_flat = pl.pallas_call(
        kernel,
        out_shape=jax.ShapeDtypeStruct((N, coutp, lout), out_dtype),
        grid_spec=pltpu.PrefetchScalarGridSpec(
            num_scalar_prefetch=0,
            grid=(N,),                                    # >=2 steps -> both v7x TCs
            in_specs=[
                pl.BlockSpec((1, Cin, lext), lambda n: (n, 0, 0)),
                pl.BlockSpec((9, coutp, Cin), lambda n: (0, 0, 0)),
                pl.BlockSpec((coutp, 1), lambda n: (0, 0)),
            ],
            out_specs=pl.BlockSpec((1, coutp, lout), lambda n: (n, 0, 0)),
        ),
        compiler_params=pltpu.CompilerParams(
            dimension_semantics=("parallel",),
            vmem_limit_bytes=vmem_limit,
        ),
        cost_estimate=cost,
    )(x_ext, w_taps, b_col)

    # Interior extraction: drop Cout / lane padding and the boundary rows/cols of
    # the padded output grid (no transpose pass; NCHW comes out directly).
    out = out_flat[:, :Cout, :L].reshape(N, Cout, Hp, Wp)[:, :, 1:H + 1, 1:W + 1]
    return out


def _reference(x_nchw, w_oihw, bias):
    # Pure-JAX reference (conv + mish), NCHW semantics.
    y = jax.lax.conv_general_dilated(
        x_nchw, w_oihw,
        window_strides=(1, 1),
        padding=((1, 1), (1, 1)),
        dimension_numbers=("NCHW", "OIHW", "NCHW"),
    )
    y = y + bias[None, :, None, None]
    return y * jnp.tanh(jax.nn.softplus(y))


if __name__ == "__main__":
    # Small shapes consistent with the module: batch=2, Cin=4, Cout=8, spatial=16.
    N, Cin, Cout, H, W = 2, 4, 8, 16, 16

    key = jax.random.PRNGKey(0)
    kx, kw, kb = jax.random.split(key, 3)
    x = jax.random.normal(kx, (N, Cin, H, W), dtype=jnp.float32)
    fan_in = Cin * 3 * 3
    bound = 1.0 / (fan_in ** 0.5)
    w = jax.random.uniform(kw, (Cout, Cin, 3, 3), jnp.float32, -bound, bound)
    b = jax.random.uniform(kb, (Cout,), jnp.float32, -bound, bound)

    ref = _reference(x, w, b)

    # f32 operands: tight accuracy check.
    out_f32 = jax.block_until_ready(conv_block_mish(x, w, b, compute_dtype=jnp.float32))
    assert out_f32.shape == (N, Cout, H, W)
    assert jnp.allclose(out_f32, ref, atol=1e-4, rtol=1e-4), "f32 mismatch vs reference"

    # Default bf16 operands (f32 accumulation / epilogue): loose accuracy check.
    out_bf16 = jax.block_until_ready(conv_block_mish(x, w, b))
    assert out_bf16.shape == (N, Cout, H, W)
    assert jnp.allclose(out_bf16, ref, atol=5e-2, rtol=5e-2), "bf16 mismatch vs reference"

    print("KERNEL_OK")
</pallas_src>

<mosaic_0001>
module attributes {stable_mosaic.version = 11 : i64} {
  func.func @_convblock_kernel(%arg0: i32, %arg1: memref<1x4x512xf32, #tpu.memory_space<vmem>>, %arg2: memref<9x8x4xf32, #tpu.memory_space<vmem>>, %arg3: memref<8x1xf32, #tpu.memory_space<vmem>>, %arg4: memref<1x8x384xf32, #tpu.memory_space<vmem>>) attributes {dimension_semantics = [#tpu.dimension_semantics<parallel>], iteration_bounds = array<i64: 2>, scalar_prefetch = 0 : i64, scratch_operands = 0 : i64, tpu.core_type = #tpu.core_type<tc>, window_params = [{transform_indices = @transform_0, window_bounds = array<i64: 1, 4, 512>}, {pipeline_mode = #tpu.pipeline_mode<synchronous>, transform_indices = @transform_1, window_bounds = array<i64: 9, 8, 4>}, {pipeline_mode = #tpu.pipeline_mode<synchronous>, transform_indices = @transform_2, window_bounds = array<i64: 8, 1>}, {transform_indices = @transform_3, window_bounds = array<i64: 1, 8, 384>}]} {
    %c0 = arith.constant 0 : index
    %c0_0 = arith.constant 0 : index
    %c0_1 = arith.constant 0 : index
    %0 = vector.load %arg1[%c0, %c0_0, %c0_1] : memref<1x4x512xf32, #tpu.memory_space<vmem>>, vector<1x4x512xf32>
    %1 = vector.shape_cast %0 : vector<1x4x512xf32> to vector<4x512xf32>
    %cst = arith.constant 0.000000e+00 : f32
    %2 = vector.broadcast %cst : f32 to vector<8x384xf32>
    %c0_2 = arith.constant 0 : index
    %c0_3 = arith.constant 0 : index
    %c0_4 = arith.constant 0 : index
    %3 = vector.load %arg2[%c0_2, %c0_3, %c0_4] : memref<9x8x4xf32, #tpu.memory_space<vmem>>, vector<1x8x4xf32>
    %4 = vector.shape_cast %3 : vector<1x8x4xf32> to vector<8x4xf32>
    %5 = vector.extract_strided_slice %1 {offsets = [0, 0], sizes = [4, 384], strides = [1, 1]} : vector<4x512xf32> to vector<4x384xf32>
    %cst_5 = arith.constant dense<0.000000e+00> : vector<8x384xf32>
    %6 = tpu.matmul %4, %5, %cst_5 {dimension_numbers = #tpu.dot_dimension_numbers<[1], [0], [0], [1], [0, 0, 1, 1], [], []>} : vector<8x4xf32>, vector<4x384xf32>, vector<8x384xf32> -> vector<8x384xf32>
    %7 = arith.addf %2, %6 : vector<8x384xf32>
    %c1 = arith.constant 1 : index
    %c0_6 = arith.constant 0 : index
    %c0_7 = arith.constant 0 : index
    %8 = vector.load %arg2[%c1, %c0_6, %c0_7] : memref<9x8x4xf32, #tpu.memory_space<vmem>>, vector<1x8x4xf32>
    %9 = vector.shape_cast %8 : vector<1x8x4xf32> to vector<8x4xf32>
    %10 = vector.extract_strided_slice %1 {offsets = [0, 1], sizes = [4, 384], strides = [1, 1]} : vector<4x512xf32> to vector<4x384xf32>
    %cst_8 = arith.constant dense<0.000000e+00> : vector<8x384xf32>
    %11 = tpu.matmul %9, %10, %cst_8 {dimension_numbers = #tpu.dot_dimension_numbers<[1], [0], [0], [1], [0, 0, 1, 1], [], []>} : vector<8x4xf32>, vector<4x384xf32>, vector<8x384xf32> -> vector<8x384xf32>
    %12 = arith.addf %7, %11 : vector<8x384xf32>
    %c2 = arith.constant 2 : index
    %c0_9 = arith.constant 0 : index
    %c0_10 = arith.constant 0 : index
    %13 = vector.load %arg2[%c2, %c0_9, %c0_10] : memref<9x8x4xf32, #tpu.memory_space<vmem>>, vector<1x8x4xf32>
    %14 = vector.shape_cast %13 : vector<1x8x4xf32> to vector<8x4xf32>
    %15 = vector.extract_strided_slice %1 {offsets = [0, 2], sizes = [4, 384], strides = [1, 1]} : vector<4x512xf32> to vector<4x384xf32>
    %cst_11 = arith.constant dense<0.000000e+00> : vector<8x384xf32>
    %16 = tpu.matmul %14, %15, %cst_11 {dimension_numbers = #tpu.dot_dimension_numbers<[1], [0], [0], [1], [0, 0, 1, 1], [], []>} : vector<8x4xf32>, vector<4x384xf32>, vector<8x384xf32> -> vector<8x384xf32>
    %17 = arith.addf %12, %16 : vector<8x384xf32>
    %c3 = arith.constant 3 : index
    %c0_12 = arith.constant 0 : index
    %c0_13 = arith.constant 0 : index
    %18 = vector.load %arg2[%c3, %c0_12, %c0_13] : memref<9x8x4xf32, #tpu.memory_space<vmem>>, vector<1x8x4xf32>
    %19 = vector.shape_cast %18 : vector<1x8x4xf32> to vector<8x4xf32>
    %20 = vector.extract_strided_slice %1 {offsets = [0, 18], sizes = [4, 384], strides = [1, 1]} : vector<4x512xf32> to vector<4x384xf32>
    %cst_14 = arith.constant dense<0.000000e+00> : vector<8x384xf32>
    %21 = tpu.matmul %19, %20, %cst_14 {dimension_numbers = #tpu.dot_dimension_numbers<[1], [0], [0], [1], [0, 0, 1, 1], [], []>} : vector<8x4xf32>, vector<4x384xf32>, vector<8x384xf32> -> vector<8x384xf32>
    %22 = arith.addf %17, %21 : vector<8x384xf32>
    %c4 = arith.constant 4 : index
    %c0_15 = arith.constant 0 : index
    %c0_16 = arith.constant 0 : index
    %23 = vector.load %arg2[%c4, %c0_15, %c0_16] : memref<9x8x4xf32, #tpu.memory_space<vmem>>, vector<1x8x4xf32>
    %24 = vector.shape_cast %23 : vector<1x8x4xf32> to vector<8x4xf32>
    %25 = vector.extract_strided_slice %1 {offsets = [0, 19], sizes = [4, 384], strides = [1, 1]} : vector<4x512xf32> to vector<4x384xf32>
    %cst_17 = arith.constant dense<0.000000e+00> : vector<8x384xf32>
    %26 = tpu.matmul %24, %25, %cst_17 {dimension_numbers = #tpu.dot_dimension_numbers<[1], [0], [0], [1], [0, 0, 1, 1], [], []>} : vector<8x4xf32>, vector<4x384xf32>, vector<8x384xf32> -> vector<8x384xf32>
    %27 = arith.addf %22, %26 : vector<8x384xf32>
    %c5 = arith.constant 5 : index
    %c0_18 = arith.constant 0 : index
    %c0_19 = arith.constant 0 : index
    %28 = vector.load %arg2[%c5, %c0_18, %c0_19] : memref<9x8x4xf32, #tpu.memory_space<vmem>>, vector<1x8x4xf32>
    %29 = vector.shape_cast %28 : vector<1x8x4xf32> to vector<8x4xf32>
    %30 = vector.extract_strided_slice %1 {offsets = [0, 20], sizes = [4, 384], strides = [1, 1]} : vector<4x512xf32> to vector<4x384xf32>
    %cst_20 = arith.constant dense<0.000000e+00> : vector<8x384xf32>
    %31 = tpu.matmul %29, %30, %cst_20 {dimension_numbers = #tpu.dot_dimension_numbers<[1], [0], [0], [1], [0, 0, 1, 1], [], []>} : vector<8x4xf32>, vector<4x384xf32>, vector<8x384xf32> -> vector<8x384xf32>
    %32 = arith.addf %27, %31 : vector<8x384xf32>
    %c6 = arith.constant 6 : index
    %c0_21 = arith.constant 0 : index
    %c0_22 = arith.constant 0 : index
    %33 = vector.load %arg2[%c6, %c0_21, %c0_22] : memref<9x8x4xf32, #tpu.memory_space<vmem>>, vector<1x8x4xf32>
    %34 = vector.shape_cast %33 : vector<1x8x4xf32> to vector<8x4xf32>
    %35 = vector.extract_strided_slice %1 {offsets = [0, 36], sizes = [4, 384], strides = [1, 1]} : vector<4x512xf32> to vector<4x384xf32>
    %cst_23 = arith.constant dense<0.000000e+00> : vector<8x384xf32>
    %36 = tpu.matmul %34, %35, %cst_23 {dimension_numbers = #tpu.dot_dimension_numbers<[1], [0], [0], [1], [0, 0, 1, 1], [], []>} : vector<8x4xf32>, vector<4x384xf32>, vector<8x384xf32> -> vector<8x384xf32>
    %37 = arith.addf %32, %36 : vector<8x384xf32>
    %c7 = arith.constant 7 : index
    %c0_24 = arith.constant 0 : index
    %c0_25 = arith.constant 0 : index
    %38 = vector.load %arg2[%c7, %c0_24, %c0_25] : memref<9x8x4xf32, #tpu.memory_space<vmem>>, vector<1x8x4xf32>
    %39 = vector.shape_cast %38 : vector<1x8x4xf32> to vector<8x4xf32>
    %40 = vector.extract_strided_slice %1 {offsets = [0, 37], sizes = [4, 384], strides = [1, 1]} : vector<4x512xf32> to vector<4x384xf32>
    %cst_26 = arith.constant dense<0.000000e+00> : vector<8x384xf32>
    %41 = tpu.matmul %39, %40, %cst_26 {dimension_numbers = #tpu.dot_dimension_numbers<[1], [0], [0], [1], [0, 0, 1, 1], [], []>} : vector<8x4xf32>, vector<4x384xf32>, vector<8x384xf32> -> vector<8x384xf32>
    %42 = arith.addf %37, %41 : vector<8x384xf32>
    %c8 = arith.constant 8 : index
    %c0_27 = arith.constant 0 : index
    %c0_28 = arith.constant 0 : index
    %43 = vector.load %arg2[%c8, %c0_27, %c0_28] : memref<9x8x4xf32, #tpu.memory_space<vmem>>, vector<1x8x4xf32>
    %44 = vector.shape_cast %43 : vector<1x8x4xf32> to vector<8x4xf32>
    %45 = vector.extract_strided_slice %1 {offsets = [0, 38], sizes = [4, 384], strides = [1, 1]} : vector<4x512xf32> to vector<4x384xf32>
    %cst_29 = arith.constant dense<0.000000e+00> : vector<8x384xf32>
    %46 = tpu.matmul %44, %45, %cst_29 {dimension_numbers = #tpu.dot_dimension_numbers<[1], [0], [0], [1], [0, 0, 1, 1], [], []>} : vector<8x4xf32>, vector<4x384xf32>, vector<8x384xf32> -> vector<8x384xf32>
    %47 = arith.addf %42, %46 : vector<8x384xf32>
    %c0_30 = arith.constant 0 : index
    %c0_31 = arith.constant 0 : index
    %48 = vector.load %arg3[%c0_30, %c0_31] : memref<8x1xf32, #tpu.memory_space<vmem>>, vector<8x1xf32>
    %49 = vector.broadcast %48 : vector<8x1xf32> to vector<8x384xf32>
    %50 = arith.addf %47, %49 : vector<8x384xf32>
    %51 = math.exp %50 : vector<8x384xf32>
    %cst_32 = arith.constant 1.000000e+00 : f32
    %52 = vector.broadcast %cst_32 : f32 to vector<8x384xf32>
    %53 = arith.addf %52, %51 : vector<8x384xf32>
    %54 = arith.mulf %53, %53 : vector<8x384xf32>
    %cst_33 = arith.constant 1.000000e+00 : f32
    %55 = vector.broadcast %cst_33 : f32 to vector<8x384xf32>
    %56 = arith.subf %54, %55 : vector<8x384xf32>
    %cst_34 = arith.constant 1.000000e+00 : f32
    %57 = vector.broadcast %cst_34 : f32 to vector<8x384xf32>
    %58 = arith.addf %54, %57 : vector<8x384xf32>
    %59 = tpu.reciprocal %58 {approx = true} : vector<8x384xf32> -> vector<8x384xf32>
    %60 = arith.mulf %58, %59 : vector<8x384xf32>
    %cst_35 = arith.constant 2.000000e+00 : f32
    %61 = vector.broadcast %cst_35 : f32 to vector<8x384xf32>
    %62 = arith.subf %61, %60 : vector<8x384xf32>
    %63 = arith.mulf %59, %62 : vector<8x384xf32>
    %64 = arith.mulf %50, %56 : vector<8x384xf32>
    %65 = arith.mulf %64, %63 : vector<8x384xf32>
    %cst_36 = arith.constant 2.000000e+01 : f32
    %66 = vector.broadcast %cst_36 : f32 to vector<8x384xf32>
    %67 = arith.cmpf ogt, %50, %66 : vector<8x384xf32>
    %68 = arith.select %67, %50, %65 : vector<8x384xi1>, vector<8x384xf32>
    %c0_37 = arith.constant 0 : index
    %c0_38 = arith.constant 0 : index
    %c0_39 = arith.constant 0 : index
    %69 = vector.load %arg4[%c0_37, %c0_38, %c0_39] : memref<1x8x384xf32, #tpu.memory_space<vmem>>, vector<1x8x384xf32>
    %70 = vector.shape_cast %69 : vector<1x8x384xf32> to vector<8x384xf32>
    %71 = vector.shape_cast %68 : vector<8x384xf32> to vector<1x8x384xf32>
    tpu.vector_store %arg4[%c0_37, %c0_38, %c0_39], %71 {strides = array<i32>} : memref<1x8x384xf32, #tpu.memory_space<vmem>>, vector<1x8x384xf32>,
    return
  }
  func.func @transform_0(%arg0: i32) -> (i32, i32, i32) {
    %c0_i32 = arith.constant 0 : i32
    %c0_i32_0 = arith.constant 0 : i32
    %c0_i32_1 = arith.constant 0 : i32
    return %arg0, %c0_i32, %c0_i32_0 : i32, i32, i32
  }
  func.func @transform_1(%arg0: i32) -> (i32, i32, i32) {
    %c0_i32 = arith.constant 0 : i32
    %c0_i32_0 = arith.constant 0 : i32
    %c0_i32_1 = arith.constant 0 : i32
    %c0_i32_2 = arith.constant 0 : i32
    return %c0_i32, %c0_i32_0, %c0_i32_1 : i32, i32, i32
  }
  func.func @transform_2(%arg0: i32) -> (i32, i32) {
    %c0_i32 = arith.constant 0 : i32
    %c0_i32_0 = arith.constant 0 : i32
    %c0_i32_1 = arith.constant 0 : i32
    return %c0_i32, %c0_i32_0 : i32, i32
  }
  func.func @transform_3(%arg0: i32) -> (i32, i32, i32) {
    %c0_i32 = arith.constant 0 : i32
    %c0_i32_0 = arith.constant 0 : i32
    %c0_i32_1 = arith.constant 0 : i32
    return %arg0, %c0_i32, %c0_i32_0 : i32, i32, i32
  }
}

</mosaic_0001>

<llo_original>
// kernel: tpu_custom_call.1
$region0: #{tpu_custom_call.1}
  #allocation0 [shape = 'u32[]', space=smem, size = 0x4, offset = 0x4, fixed_abs, tag = 'smem constant byte address 0x4 - core index']
  #allocation1 [shape = 'u32[144,128]{1,0:T(1,128)}', space=vmem, size = 0x12000, scoped, tag = 'internal scratch']
  %s0 = inlined_call_operand.vmem [shape: f32[2,4,512], index: 0, kind: input, shape index: {}]
  %s1 = inlined_call_operand.vmem [shape: f32[9,8,4], index: 1, kind: input, shape index: {}]
  %s2 = inlined_call_operand.vmem [shape: f32[8,1], index: 2, kind: input, shape index: {}]
  %s3 = inlined_call_operand.hbm [shape: f32[2,8,384], index: 3, kind: output, shape index: {}]
  %s4 = sld [smem:[#allocation0]]
  $region45: #{tpu_custom_call.1} parent=0
    _
  %s6 = ssub.s32 1, %s4
  %s7 = scalar_select 0, %s6, %s4
  $region1: #{tpu_custom_call.1} parent=0
    #allocation2 [shape = 'u8[24576]{0}', space=vmem, size = 0x6000, scoped, tag = 'output window, operand 0']
    #allocation3 [shape = 's32[2]{0}', space=sflag, size = 0x8, scoped, tag = 'scoped memory for tpu_custom_call.1']
    %8 = vsyncpa [#allocation3], 0
    %s9 = scalar_lea.sflag [#allocation3], 1
    %10 = vsyncpa %s9, 0
    loop: start=0, step=1, limit=4
    $region2: #{tpu_custom_call.1} parent=1 // loop_pre_header
      _
    $region3: #{tpu_custom_call.1} parent=1 // loop_header
      %s12 = sphi 0, %s16
      %p13 = scmp.ge.s32.totalorder %s12, 4
      %s22 = sphi 0, %s24
      %s25 = sphi 0, %s22
      %s26 = sphi 0, %s25
      %s42 = sphi 0, %s26
      %s46 = sphi 0, %s46
      %s48 = sphi 0, %s46
      %s49 = sphi 0, %s48
      %s63 = sphi 0, %s49
      %s67 = sphi 0, %s67
      %s69 = sphi 0, %s67
      %s70 = sphi 0, %s69
      %s84 = sphi 0, %s70
      %s90 = sphi 0, %s92
      %s93 = sphi 0, %s90
      %s94 = sphi 0, %s93
      %s110 = sphi 0, %s94
    $region4: #{tpu_custom_call.1} parent=1 // loop_header_branch
      %15 = sbr.rel (%p13) target = $region8
    $region5: #{tpu_custom_call.1} parent=1 // loop_body
      %s17 = ssub.s32 %s12, 1
      %s18 = ssub.s32 %s12, 2
      %s19 = sadd.s32 %s12, 1
      %s20 = ssub.s32 %s12, %s19
      %p21 = scmp.eq.s32.totalorder %s20, 0
      %s23 = sadd.s32 %s22, 1
      %s24 = scalar_select %p21, %s22, %s23
      %p27 = pneg %p21
      %p28 = scmp.eq.s32.totalorder %s12, 1
      %p29 = por %p27, %p28
      %p30 = scmp.ne.s32.totalorder %s22, %s25
      %p31 = scmp.eq.s32.totalorder %s12, 0
      %p32 = por %p30, %p31
      %p33 = scmp.ne.s32.totalorder %s22, %s25
      %p34 = scmp.eq.s32.totalorder %s17, 1
      %p35 = por %p33, %p34
      %p36 = scmp.ne.s32.totalorder %s25, %s26
      %p37 = scmp.eq.s32.totalorder %s17, 0
      %p38 = por %p36, %p37
      %p39 = scmp.ne.s32.totalorder %s25, %s26
      %p40 = scmp.eq.s32.totalorder %s18, 1
      %p41 = por %p39, %p40
      %p43 = scmp.ne.s32.totalorder %s26, %s42
      %p44 = scmp.eq.s32.totalorder %s18, 0
      %p45 = por %p43, %p44
      %s47 = sadd.s32 %s46, 1
      %p50 = scmp.eq.s32.totalorder %s12, 1
      %p51 = scmp.ne.s32.totalorder %s46, %s48
      %p52 = scmp.eq.s32.totalorder %s12, 0
      %p53 = por %p51, %p52
      %p54 = scmp.ne.s32.totalorder %s46, %s48
      %p55 = scmp.eq.s32.totalorder %s17, 1
      %p56 = por %p54, %p55
      %p57 = scmp.ne.s32.totalorder %s48, %s49
      %p58 = scmp.eq.s32.totalorder %s17, 0
      %p59 = por %p57, %p58
      %p60 = scmp.ne.s32.totalorder %s48, %s49
      %p61 = scmp.eq.s32.totalorder %s18, 1
      %p62 = por %p60, %p61
      %p64 = scmp.ne.s32.totalorder %s49, %s63
      %p65 = scmp.eq.s32.totalorder %s18, 0
      %p66 = por %p64, %p65
      %s68 = sadd.s32 %s67, 1
      %p71 = scmp.eq.s32.totalorder %s12, 1
      %p72 = scmp.ne.s32.totalorder %s67, %s69
      %p73 = scmp.eq.s32.totalorder %s12, 0
      %p74 = por %p72, %p73
      %p75 = scmp.ne.s32.totalorder %s67, %s69
      %p76 = scmp.eq.s32.totalorder %s17, 1
      %p77 = por %p75, %p76
      %p78 = scmp.ne.s32.totalorder %s69, %s70
      %p79 = scmp.eq.s32.totalorder %s17, 0
      %p80 = por %p78, %p79
      %p81 = scmp.ne.s32.totalorder %s69, %s70
      %p82 = scmp.eq.s32.totalorder %s18, 1
      %p83 = por %p81, %p82
      %p85 = scmp.ne.s32.totalorder %s70, %s84
      %p86 = scmp.eq.s32.totalorder %s18, 0
      %p87 = por %p85, %p86
      %s88 = ssub.s32 %s12, %s19
      %p89 = scmp.eq.s32.totalorder %s88, 0
      %s91 = sadd.s32 %s90, 1
      %s92 = scalar_select %p89, %s90, %s91
      %p95 = pneg %p89
      %p96 = scmp.eq.s32.totalorder %s12, 1
      %p97 = por %p95, %p96
      %p98 = scmp.ne.s32.totalorder %s90, %s93
      %p99 = scmp.eq.s32.totalorder %s12, 0
      %p100 = por %p98, %p99
      %p101 = scmp.ne.s32.totalorder %s90, %s93
      %p102 = scmp.eq.s32.totalorder %s17, 1
      %p103 = por %p101, %p102
      %p104 = scmp.ne.s32.totalorder %s93, %s94
      %p105 = scmp.eq.s32.totalorder %s17, 0
      %p106 = por %p104, %p105
      %p107 = scmp.ne.s32.totalorder %s93, %s94
      %p108 = scmp.eq.s32.totalorder %s18, 1
      %p109 = por %p107, %p108
      %p111 = scmp.ne.s32.totalorder %s94, %s110
      %p112 = scmp.eq.s32.totalorder %s18, 0
      %p113 = por %p111, %p112
      %p114 = scmp.le.s32.totalorder 1, %s12
      %p115 = scmp.lt.s32.totalorder %s12, 3
      %p116 = pnand %p114, %p115
      %p117 = pneg %p116
      // Predicated region
      $region9: #{tpu_custom_call.1} parent=5 // pred_check
        _
      $region10: #{tpu_custom_call.1} parent=5 // pred_check_branch
        %119 = sbr.rel (%p116) target = $region12
      $region11: #{tpu_custom_call.1} parent=5 // pred_region
        %s120 = ssub.s32 %s12, 1
        // Predicated region
        $region13: #{tpu_custom_call.1} parent=11 // pred_check
          %p121 = pneg %p59
        $region14: #{tpu_custom_call.1} parent=11 // pred_check_branch
          %123 = sbr.rel (%p121) target = $region16
        $region15: #{tpu_custom_call.1} parent=11 // pred_region
          _
        $region16: #{tpu_custom_call.1} parent=11 // pred_fallthru
          _
        // Predicated region
        $region17: #{tpu_custom_call.1} parent=11 // pred_check
          %p124 = pneg %p80
        $region18: #{tpu_custom_call.1} parent=11 // pred_check_branch
          %126 = sbr.rel (%p124) target = $region20
        $region19: #{tpu_custom_call.1} parent=11 // pred_region
          _
        $region20: #{tpu_custom_call.1} parent=11 // pred_fallthru
          _
      $region12: #{tpu_custom_call.1} parent=5 // pred_fallthru
        _
      %p127 = scmp.lt.s32.totalorder %s12, 2
      // Predicated region
      $region21: #{tpu_custom_call.1} parent=5 // pred_check
        %p128 = pneg %p127
      $region22: #{tpu_custom_call.1} parent=5 // pred_check_branch
        %130 = sbr.rel (%p128) target = $region24
      $region23: #{tpu_custom_call.1} parent=5 // pred_region
        // Predicated region
        $region25: #{tpu_custom_call.1} parent=23 // pred_check
          %p131 = pneg %p32
        $region26: #{tpu_custom_call.1} parent=23 // pred_check_branch
          %133 = sbr.rel (%p131) target = $region28
        $region27: #{tpu_custom_call.1} parent=23 // pred_region
          %p134 = scmp.lt.s32.totalorder %s12, 1
          %s135 = scalar_select %p134, %s12, 1
          %s136 = smul.addr %s135, 4
          %s137 = smul.addr %s136, 4
          %s138 = scalar_lea.vmem %s0, %s137
        $region28: #{tpu_custom_call.1} parent=23 // pred_fallthru
          _
      $region24: #{tpu_custom_call.1} parent=5 // pred_fallthru
        _
      %p139 = scmp.le.s32.totalorder 1, %s12
      %p140 = scmp.lt.s32.totalorder %s12, 3
      %p141 = pnand %p139, %p140
      %p142 = pneg %p141
      // Predicated region
      $region29: #{tpu_custom_call.1} parent=5 // pred_check
        _
      $region30: #{tpu_custom_call.1} parent=5 // pred_check_branch
        %144 = sbr.rel (%p141) target = $region32
      $region31: #{tpu_custom_call.1} parent=5 // pred_region
        %s145 = ssub.s32 %s12, 1
        %p146 = scmp.lt.s32.totalorder %s17, 1
        %s147 = scalar_select %p146, %s17, 1
        %s148 = smul.addr %s147, 4
        %s149 = smul.addr %s148, 4
        %s150 = scalar_lea.vmem %s0, %s149
        %p151 = pneg %p38
        %p152 = pneg %p35
        %p153 = pneg %p59
        %p154 = pneg %p56
        %p155 = pneg %p80
        %p156 = pneg %p77
        %p157 = pneg %p106
        %p158 = pneg %p103
        %s159 = sand.u32 %s93, 1
        %s160 = scalar_lea.sflag [#allocation3], %s159
        %s161 = sand.u32 %s93, 1
        %s162 = smul.addr %s161, 24
        %s163 = scalar_lea.vmem [#allocation2], %s162
        %p164 = scmp.lt.s32.totalorder %s17, 1
        %s165 = scalar_select %p164, %s17, 1
        %s166 = smul.addr %s165, 4
        %s167 = smul.addr %s166, 4
        %s168 = scalar_lea.vmem %s0, %s167
        %v169 = vld [vmem:[%s168] sm:$0xff]
        %v170 = vld [vmem:[%s168 + $0x8] sm:$0xff]
        %v171 = vld [vmem:[%s1] sm:$0xff]
        %s172 = scalar_lea.vmem %s1, 8
        %v173 = vld [vmem:[%s172] sm:$0xff]
        %v176 = vcombine.high %v169, %v169
        %v177 = vcombine.high %v170, %v170
        %178 = vrot.lane.b32.xlu0 %v169, 127
        %v179 = vpop.permute.xlu0 %178
        %180 = vrot.lane.b32.xlu0 %v176, 127
        %v181 = vpop.permute.xlu0 %180
        %182 = vrot.lane.b32.xlu0 %v170, 127
        %v183 = vpop.permute.xlu0 %182
        %184 = vrot.lane.b32.xlu0 %v177, 127
        %v185 = vpop.permute.xlu0 %184
        %vm186 = vcmask 1039360
        %v187 = vsel %vm186, %v179, %v181
        %v188 = vsel %vm186, %v181, %v183
        %v189 = vsel %vm186, %v183, %v185
        %vm190 = vcmask 31744
        %v192 = vsel %vm190, %v173, 0
        %vm194 = vcmask 1043456
        %v195 = vsel %vm194, %v187, 0
        %v197 = vsel %vm194, %v188, 0
        %v199 = vsel %vm194, %v189, 0
        %201 = vmatprep.subr.mxu0 0.0
        %202 = vmatpush1.msra.mxu0 0.0
        %203 = vmatprep.subr.mxu0 0.0
        %204 = vmatpush1.msra.mxu0 0.0
        %205 = vmatprep.subr.mxu0 0.0
        %206 = vmatpush1.msra.mxu0 0.0
        %207 = vmatprep.subr.mxu0 0.0
        %208 = vmatpush1.msra.mxu0 0.0
        %209 = vmatprep.subr.mxu0 0.0
        %210 = vmatpush1.msra.mxu0 0.0
        %211 = vmatprep.subr.mxu0 0.0
        %212 = vmatpush1.msra.mxu0 0.0
        %213 = vmatprep.subr.mxu0 0.0
        %214 = vmatpush1.msra.mxu0 0.0
        %215 = vmatprep.subr.mxu0 0.0
        %216 = vmatpush1.msra.mxu0 0.0
        %217 = vmatprep.subr.mxu0 0.0
        %218 = vmatpush1.msra.mxu0 0.0
        %219 = vmatprep.subr.mxu0 0.0
        %220 = vmatpush1.msra.mxu0 0.0
        %221 = vmatprep.subr.mxu0 0.0
        %222 = vmatpush1.msra.mxu0 0.0
        %223 = vmatprep.subr.mxu0 0.0
        %224 = vmatpush1.msra.mxu0 0.0
        %225 = vmatprep.subr.mxu0 0.0
        %226 = vmatpush1.msra.mxu0 0.0
        %227 = vmatprep.subr.mxu0 0.0
        %228 = vmatpush1.msra.mxu0 0.0
        %229 = vmatprep.subr.mxu0 0.0
        %230 = vmatpush1.msra.mxu0 0.0
        %231 = vmatprep.subr.mxu0 %v197
        %232 = vmatpush1.msra.mxu0 %v195
        %233 = vmatprep.subr.mxu0 0.0
        %234 = vmatpush2.msra.mxu0 0.0
        %235 = vmatprep.subr.mxu0 0.0
        %236 = vmatpush2.msra.mxu0 0.0
        %237 = vmatprep.subr.mxu0 0.0
        %238 = vmatpush2.msra.mxu0 0.0
        %239 = vmatprep.subr.mxu0 0.0
        %240 = vmatpush2.msra.mxu0 0.0
        %241 = vmatprep.subr.mxu0 0.0
        %242 = vmatpush2.msra.mxu0 0.0
        %243 = vmatprep.subr.mxu0 0.0
        %244 = vmatpush2.msra.mxu0 0.0
        %245 = vmatprep.subr.mxu0 0.0
        %246 = vmatpush2.msra.mxu0 0.0
        %247 = vmatprep.subr.mxu0 0.0
        %248 = vmatpush2.msra.mxu0 0.0
        %249 = vmatprep.subr.mxu0 0.0
        %250 = vmatpush2.msra.mxu0 0.0
        %251 = vmatprep.subr.mxu0 0.0
        %252 = vmatpush2.msra.mxu0 0.0
        %253 = vmatprep.subr.mxu0 0.0
        %254 = vmatpush2.msra.mxu0 0.0
        %255 = vmatprep.subr.mxu0 0.0
        %256 = vmatpush2.msra.mxu0 0.0
        %257 = vmatprep.subr.mxu0 0.0
        %258 = vmatpush2.msra.mxu0 0.0
        %259 = vmatprep.subr.mxu0 0.0
        %260 = vmatpush2.msra.mxu0 0.0
        %261 = vmatprep.subr.mxu0 0.0
        %262 = vmatpush2.msra.mxu0 0.0
        %263 = vmatprep.subr.mxu0 0.0
        %264 = vmatpush2.msra.mxu0 0.0
        %265 = vmatprep.mubr.f32.mxu0 0.0
        %266 = vmatmul.mubr.f32.gmra.mxu0 %v192
        %v267 = vpop.f32.mrf.mxu0
        %v268 = vadd.f32 0.0, %v267
        %v269 = vpop.f32.mrf.mxu0
        %v270 = vadd.f32 0.0, %v269
        %271 = vdwg.mxu0
        %272 = vmatprep.subr.mxu0 0.0
        %273 = vmatpush1.msra.mxu0 0.0
        %274 = vmatprep.subr.mxu0 0.0
        %275 = vmatpush1.msra.mxu0 0.0
        %276 = vmatprep.subr.mxu0 0.0
        %277 = vmatpush1.msra.mxu0 0.0
        %278 = vmatprep.subr.mxu0 0.0
        %279 = vmatpush1.msra.mxu0 0.0
        %280 = vmatprep.subr.mxu0 0.0
        %281 = vmatpush1.msra.mxu0 0.0
        %282 = vmatprep.subr.mxu0 0.0
        %283 = vmatpush1.msra.mxu0 0.0
        %284 = vmatprep.subr.mxu0 0.0
        %285 = vmatpush1.msra.mxu0 0.0
        %286 = vmatprep.subr.mxu0 0.0
        %287 = vmatpush1.msra.mxu0 0.0
        %288 = vmatprep.subr.mxu0 0.0
        %289 = vmatpush1.msra.mxu0 0.0
        %290 = vmatprep.subr.mxu0 0.0
        %291 = vmatpush1.msra.mxu0 0.0
        %292 = vmatprep.subr.mxu0 0.0
        %293 = vmatpush1.msra.mxu0 0.0
        %294 = vmatprep.subr.mxu0 0.0
        %295 = vmatpush1.msra.mxu0 0.0
        %296 = vmatprep.subr.mxu0 0.0
        %297 = vmatpush1.msra.mxu0 0.0
        %298 = vmatprep.subr.mxu0 0.0
        %299 = vmatpush1.msra.mxu0 0.0
        %300 = vmatprep.subr.mxu0 0.0
        %301 = vmatpush1.msra.mxu0 0.0
        %302 = vmatprep.subr.mxu0 0.0
        %303 = vmatpush1.msra.mxu0 %v199
        %304 = vmatprep.subr.mxu0 0.0
        %305 = vmatpush2.msra.mxu0 0.0
        %306 = vmatprep.subr.mxu0 0.0
        %307 = vmatpush2.msra.mxu0 0.0
        %308 = vmatprep.subr.mxu0 0.0
        %309 = vmatpush2.msra.mxu0 0.0
        %310 = vmatprep.subr.mxu0 0.0
        %311 = vmatpush2.msra.mxu0 0.0
        %312 = vmatprep.subr.mxu0 0.0
        %313 = vmatpush2.msra.mxu0 0.0
        %314 = vmatprep.subr.mxu0 0.0
        %315 = vmatpush2.msra.mxu0 0.0
        %316 = vmatprep.subr.mxu0 0.0
        %317 = vmatpush2.msra.mxu0 0.0
        %318 = vmatprep.subr.mxu0 0.0
        %319 = vmatpush2.msra.mxu0 0.0
        %320 = vmatprep.subr.mxu0 0.0
        %321 = vmatpush2.msra.mxu0 0.0
        %322 = vmatprep.subr.mxu0 0.0
        %323 = vmatpush2.msra.mxu0 0.0
        %324 = vmatprep.subr.mxu0 0.0
        %325 = vmatpush2.msra.mxu0 0.0
        %326 = vmatprep.subr.mxu0 0.0
        %327 = vmatpush2.msra.mxu0 0.0
        %328 = vmatprep.subr.mxu0 0.0
        %329 = vmatpush2.msra.mxu0 0.0
        %330 = vmatprep.subr.mxu0 0.0
        %331 = vmatpush2.msra.mxu0 0.0
        %332 = vmatprep.subr.mxu0 0.0
        %333 = vmatpush2.msra.mxu0 0.0
        %334 = vmatprep.subr.mxu0 0.0
        %335 = vmatpush2.msra.mxu0 0.0
        %336 = vmatprep.mubr.f32.mxu0 0.0
        %337 = vmatmul.mubr.f32.gmra.mxu0 %v192
        %v338 = vpop.f32.mrf.mxu0
        %v339 = vadd.f32 0.0, %v338
        %v340 = vpop.f32.mrf.mxu0
        %341 = vdwg.mxu0
        %v343 = vsel %vm190, %v171, 0
        %v345 = vsel %vm194, %v169, 0
        %v347 = vsel %vm194, %v176, 0
        %v349 = vsel %vm194, %v170, 0
        %351 = vmatprep.subr.mxu0 0.0
        %352 = vmatpush1.msra.mxu0 0.0
        %353 = vmatprep.subr.mxu0 0.0
        %354 = vmatpush1.msra.mxu0 0.0
        %355 = vmatprep.subr.mxu0 0.0
        %356 = vmatpush1.msra.mxu0 0.0
        %357 = vmatprep.subr.mxu0 0.0
        %358 = vmatpush1.msra.mxu0 0.0
        %359 = vmatprep.subr.mxu0 0.0
        %360 = vmatpush1.msra.mxu0 0.0
        %361 = vmatprep.subr.mxu0 0.0
        %362 = vmatpush1.msra.mxu0 0.0
        %363 = vmatprep.subr.mxu0 0.0
        %364 = vmatpush1.msra.mxu0 0.0
        %365 = vmatprep.subr.mxu0 0.0
        %366 = vmatpush1.msra.mxu0 0.0
        %367 = vmatprep.subr.mxu0 0.0
        %368 = vmatpush1.msra.mxu0 0.0
        %369 = vmatprep.subr.mxu0 0.0
        %370 = vmatpush1.msra.mxu0 0.0
        %371 = vmatprep.subr.mxu0 0.0
        %372 = vmatpush1.msra.mxu0 0.0
        %373 = vmatprep.subr.mxu0 0.0
        %374 = vmatpush1.msra.mxu0 0.0
        %375 = vmatprep.subr.mxu0 0.0
        %376 = vmatpush1.msra.mxu0 0.0
        %377 = vmatprep.subr.mxu0 0.0
        %378 = vmatpush1.msra.mxu0 0.0
        %379 = vmatprep.subr.mxu0 0.0
        %380 = vmatpush1.msra.mxu0 0.0
        %381 = vmatprep.subr.mxu0 %v347
        %382 = vmatpush1.msra.mxu0 %v345
        %383 = vmatprep.subr.mxu0 0.0
        %384 = vmatpush2.msra.mxu0 0.0
        %385 = vmatprep.subr.mxu0 0.0
        %386 = vmatpush2.msra.mxu0 0.0
        %387 = vmatprep.subr.mxu0 0.0
        %388 = vmatpush2.msra.mxu0 0.0
        %389 = vmatprep.subr.mxu0 0.0
        %390 = vmatpush2.msra.mxu0 0.0
        %391 = vmatprep.subr.mxu0 0.0
        %392 = vmatpush2.msra.mxu0 0.0
        %393 = vmatprep.subr.mxu0 0.0
        %394 = vmatpush2.msra.mxu0 0.0
        %395 = vmatprep.subr.mxu0 0.0
        %396 = vmatpush2.msra.mxu0 0.0
        %397 = vmatprep.subr.mxu0 0.0
        %398 = vmatpush2.msra.mxu0 0.0
        %399 = vmatprep.subr.mxu0 0.0
        %400 = vmatpush2.msra.mxu0 0.0
        %401 = vmatprep.subr.mxu0 0.0
        %402 = vmatpush2.msra.mxu0 0.0
        %403 = vmatprep.subr.mxu0 0.0
        %404 = vmatpush2.msra.mxu0 0.0
        %405 = vmatprep.subr.mxu0 0.0
        %406 = vmatpush2.msra.mxu0 0.0
        %407 = vmatprep.subr.mxu0 0.0
        %408 = vmatpush2.msra.mxu0 0.0
        %409 = vmatprep.subr.mxu0 0.0
        %410 = vmatpush2.msra.mxu0 0.0
        %411 = vmatprep.subr.mxu0 0.0
        %412 = vmatpush2.msra.mxu0 0.0
        %413 = vmatprep.subr.mxu0 0.0
        %414 = vmatpush2.msra.mxu0 0.0
        %415 = vmatprep.mubr.f32.mxu0 0.0
        %416 = vmatmul.mubr.f32.gmra.mxu0 %v343
        %v417 = vpop.f32.mrf.mxu0
        %v418 = vadd.f32 %v268, %v417
        %v419 = vpop.f32.mrf.mxu0
        %v420 = vadd.f32 %v270, %v419
        %421 = vdwg.mxu0
        %422 = vmatprep.subr.mxu0 0.0
        %423 = vmatpush1.msra.mxu0 0.0
        %424 = vmatprep.subr.mxu0 0.0
        %425 = vmatpush1.msra.mxu0 0.0
        %426 = vmatprep.subr.mxu0 0.0
        %427 = vmatpush1.msra.mxu0 0.0
        %428 = vmatprep.subr.mxu0 0.0
        %429 = vmatpush1.msra.mxu0 0.0
        %430 = vmatprep.subr.mxu0 0.0
        %431 = vmatpush1.msra.mxu0 0.0
        %432 = vmatprep.subr.mxu0 0.0
        %433 = vmatpush1.msra.mxu0 0.0
        %434 = vmatprep.subr.mxu0 0.0
        %435 = vmatpush1.msra.mxu0 0.0
        %436 = vmatprep.subr.mxu0 0.0
        %437 = vmatpush1.msra.mxu0 0.0
        %438 = vmatprep.subr.mxu0 0.0
        %439 = vmatpush1.msra.mxu0 0.0
        %440 = vmatprep.subr.mxu0 0.0
        %441 = vmatpush1.msra.mxu0 0.0
        %442 = vmatprep.subr.mxu0 0.0
        %443 = vmatpush1.msra.mxu0 0.0
        %444 = vmatprep.subr.mxu0 0.0
        %445 = vmatpush1.msra.mxu0 0.0
        %446 = vmatprep.subr.mxu0 0.0
        %447 = vmatpush1.msra.mxu0 0.0
        %448 = vmatprep.subr.mxu0 0.0
        %449 = vmatpush1.msra.mxu0 0.0
        %450 = vmatprep.subr.mxu0 0.0
        %451 = vmatpush1.msra.mxu0 0.0
        %452 = vmatprep.subr.mxu0 0.0
        %453 = vmatpush1.msra.mxu0 %v349
        %454 = vmatprep.subr.mxu0 0.0
        %455 = vmatpush2.msra.mxu0 0.0
        %456 = vmatprep.subr.mxu0 0.0
        %457 = vmatpush2.msra.mxu0 0.0
        %458 = vmatprep.subr.mxu0 0.0
        %459 = vmatpush2.msra.mxu0 0.0
        %460 = vmatprep.subr.mxu0 0.0
        %461 = vmatpush2.msra.mxu0 0.0
        %462 = vmatprep.subr.mxu0 0.0
        %463 = vmatpush2.msra.mxu0 0.0
        %464 = vmatprep.subr.mxu0 0.0
        %465 = vmatpush2.msra.mxu0 0.0
        %466 = vmatprep.subr.mxu0 0.0
        %467 = vmatpush2.msra.mxu0 0.0
        %468 = vmatprep.subr.mxu0 0.0
        %469 = vmatpush2.msra.mxu0 0.0
        %470 = vmatprep.subr.mxu0 0.0
        %471 = vmatpush2.msra.mxu0 0.0
        %472 = vmatprep.subr.mxu0 0.0
        %473 = vmatpush2.msra.mxu0 0.0
        %474 = vmatprep.subr.mxu0 0.0
        %475 = vmatpush2.msra.mxu0 0.0
        %476 = vmatprep.subr.mxu0 0.0
        %477 = vmatpush2.msra.mxu0 0.0
        %478 = vmatprep.subr.mxu0 0.0
        %479 = vmatpush2.msra.mxu0 0.0
        %480 = vmatprep.subr.mxu0 0.0
        %481 = vmatpush2.msra.mxu0 0.0
        %482 = vmatprep.subr.mxu0 0.0
        %483 = vmatpush2.msra.mxu0 0.0
        %484 = vmatprep.subr.mxu0 0.0
        %485 = vmatpush2.msra.mxu0 0.0
        %486 = vmatprep.mubr.f32.mxu0 0.0
        %487 = vmatmul.mubr.f32.gmra.mxu0 %v343
        %v488 = vpop.f32.mrf.mxu0
        %v489 = vadd.f32 %v339, %v488
        %v490 = vpop.f32.mrf.mxu0
        %491 = vdwg.mxu0
        %s492 = scalar_lea.vmem %s1, 16
        %v493 = vld [vmem:[%s492] sm:$0xff]
        %494 = vrot.lane.b32.xlu0 %v169, 126
        %v495 = vpop.permute.xlu0 %494
        %496 = vrot.lane.b32.xlu0 %v176, 126
        %v497 = vpop.permute.xlu0 %496
        %498 = vrot.lane.b32.xlu0 %v170, 126
        %v499 = vpop.permute.xlu0 %498
        %500 = vrot.lane.b32.xlu0 %v177, 126
        %v501 = vpop.permute.xlu0 %500
        %vm502 = vcmask 1031168
        %v503 = vsel %vm502, %v495, %v497
        %v504 = vsel %vm502, %v497, %v499
        %v505 = vsel %vm502, %v499, %v501
        %v507 = vsel %vm190, %v493, 0
        %v509 = vsel %vm194, %v503, 0
        %v511 = vsel %vm194, %v504, 0
        %v513 = vsel %vm194, %v505, 0
        %515 = vmatprep.subr.mxu0 0.0
        %516 = vmatpush1.msra.mxu0 0.0
        %517 = vmatprep.subr.mxu0 0.0
        %518 = vmatpush1.msra.mxu0 0.0
        %519 = vmatprep.subr.mxu0 0.0
        %520 = vmatpush1.msra.mxu0 0.0
        %521 = vmatprep.subr.mxu0 0.0
        %522 = vmatpush1.msra.mxu0 0.0
        %523 = vmatprep.subr.mxu0 0.0
        %524 = vmatpush1.msra.mxu0 0.0
        %525 = vmatprep.subr.mxu0 0.0
        %526 = vmatpush1.msra.mxu0 0.0
        %527 = vmatprep.subr.mxu0 0.0
        %528 = vmatpush1.msra.mxu0 0.0
        %529 = vmatprep.subr.mxu0 0.0
        %530 = vmatpush1.msra.mxu0 0.0
        %531 = vmatprep.subr.mxu0 0.0
        %532 = vmatpush1.msra.mxu0 0.0
        %533 = vmatprep.subr.mxu0 0.0
        %534 = vmatpush1.msra.mxu0 0.0
        %535 = vmatprep.subr.mxu0 0.0
        %536 = vmatpush1.msra.mxu0 0.0
        %537 = vmatprep.subr.mxu0 0.0
        %538 = vmatpush1.msra.mxu0 0.0
        %539 = vmatprep.subr.mxu0 0.0
        %540 = vmatpush1.msra.mxu0 0.0
        %541 = vmatprep.subr.mxu0 0.0
        %542 = vmatpush1.msra.mxu0 0.0
        %543 = vmatprep.subr.mxu0 0.0
        %544 = vmatpush1.msra.mxu0 0.0
        %545 = vmatprep.subr.mxu0 %v511
        %546 = vmatpush1.msra.mxu0 %v509
        %547 = vmatprep.subr.mxu0 0.0
        %548 = vmatpush2.msra.mxu0 0.0
        %549 = vmatprep.subr.mxu0 0.0
        %550 = vmatpush2.msra.mxu0 0.0
        %551 = vmatprep.subr.mxu0 0.0
        %552 = vmatpush2.msra.mxu0 0.0
        %553 = vmatprep.subr.mxu0 0.0
        %554 = vmatpush2.msra.mxu0 0.0
        %555 = vmatprep.subr.mxu0 0.0
        %556 = vmatpush2.msra.mxu0 0.0
        %557 = vmatprep.subr.mxu0 0.0
        %558 = vmatpush2.msra.mxu0 0.0
        %559 = vmatprep.subr.mxu0 0.0
        %560 = vmatpush2.msra.mxu0 0.0
        %561 = vmatprep.subr.mxu0 0.0
        %562 = vmatpush2.msra.mxu0 0.0
        %563 = vmatprep.subr.mxu0 0.0
        %564 = vmatpush2.msra.mxu0 0.0
        %565 = vmatprep.subr.mxu0 0.0
        %566 = vmatpush2.msra.mxu0 0.0
        %567 = vmatprep.subr.mxu0 0.0
        %568 = vmatpush2.msra.mxu0 0.0
        %569 = vmatprep.subr.mxu0 0.0
        %570 = vmatpush2.msra.mxu0 0.0
        %571 = vmatprep.subr.mxu0 0.0
        %572 = vmatpush2.msra.mxu0 0.0
        %573 = vmatprep.subr.mxu0 0.0
        %574 = vmatpush2.msra.mxu0 0.0
        %575 = vmatprep.subr.mxu0 0.0
        %576 = vmatpush2.msra.mxu0 0.0
        %577 = vmatprep.subr.mxu0 0.0
        %578 = vmatpush2.msra.mxu0 0.0
        %579 = vmatprep.mubr.f32.mxu0 0.0
        %580 = vmatmul.mubr.f32.gmra.mxu0 %v507
        %v581 = vpop.f32.mrf.mxu0
        %v582 = vadd.f32 0.0, %v581
        %v583 = vpop.f32.mrf.mxu0
        %v584 = vadd.f32 0.0, %v583
        %585 = vdwg.mxu0
        %586 = vmatprep.subr.mxu0 0.0
        %587 = vmatpush1.msra.mxu0 0.0
        %588 = vmatprep.subr.mxu0 0.0
        %589 = vmatpush1.msra.mxu0 0.0
        %590 = vmatprep.subr.mxu0 0.0
        %591 = vmatpush1.msra.mxu0 0.0
        %592 = vmatprep.subr.mxu0 0.0
        %593 = vmatpush1.msra.mxu0 0.0
        %594 = vmatprep.subr.mxu0 0.0
        %595 = vmatpush1.msra.mxu0 0.0
        %596 = vmatprep.subr.mxu0 0.0
        %597 = vmatpush1.msra.mxu0 0.0
        %598 = vmatprep.subr.mxu0 0.0
        %599 = vmatpush1.msra.mxu0 0.0
        %600 = vmatprep.subr.mxu0 0.0
        %601 = vmatpush1.msra.mxu0 0.0
        %602 = vmatprep.subr.mxu0 0.0
        %603 = vmatpush1.msra.mxu0 0.0
        %604 = vmatprep.subr.mxu0 0.0
        %605 = vmatpush1.msra.mxu0 0.0
        %606 = vmatprep.subr.mxu0 0.0
        %607 = vmatpush1.msra.mxu0 0.0
        %608 = vmatprep.subr.mxu0 0.0
        %609 = vmatpush1.msra.mxu0 0.0
        %610 = vmatprep.subr.mxu0 0.0
        %611 = vmatpush1.msra.mxu0 0.0
        %612 = vmatprep.subr.mxu0 0.0
        %613 = vmatpush1.msra.mxu0 0.0
        %614 = vmatprep.subr.mxu0 0.0
        %615 = vmatpush1.msra.mxu0 0.0
        %616 = vmatprep.subr.mxu0 0.0
        %617 = vmatpush1.msra.mxu0 %v513
        %618 = vmatprep.subr.mxu0 0.0
        %619 = vmatpush2.msra.mxu0 0.0
        %620 = vmatprep.subr.mxu0 0.0
        %621 = vmatpush2.msra.mxu0 0.0
        %622 = vmatprep.subr.mxu0 0.0
        %623 = vmatpush2.msra.mxu0 0.0
        %624 = vmatprep.subr.mxu0 0.0
        %625 = vmatpush2.msra.mxu0 0.0
        %626 = vmatprep.subr.mxu0 0.0
        %627 = vmatpush2.msra.mxu0 0.0
        %628 = vmatprep.subr.mxu0 0.0
        %629 = vmatpush2.msra.mxu0 0.0
        %630 = vmatprep.subr.mxu0 0.0
        %631 = vmatpush2.msra.mxu0 0.0
        %632 = vmatprep.subr.mxu0 0.0
        %633 = vmatpush2.msra.mxu0 0.0
        %634 = vmatprep.subr.mxu0 0.0
        %635 = vmatpush2.msra.mxu0 0.0
        %636 = vmatprep.subr.mxu0 0.0
        %637 = vmatpush2.msra.mxu0 0.0
        %638 = vmatprep.subr.mxu0 0.0
        %639 = vmatpush2.msra.mxu0 0.0
        %640 = vmatprep.subr.mxu0 0.0
        %641 = vmatpush2.msra.mxu0 0.0
        %642 = vmatprep.subr.mxu0 0.0
        %643 = vmatpush2.msra.mxu0 0.0
        %644 = vmatprep.subr.mxu0 0.0
        %645 = vmatpush2.msra.mxu0 0.0
        %646 = vmatprep.subr.mxu0 0.0
        %647 = vmatpush2.msra.mxu0 0.0
        %648 = vmatprep.subr.mxu0 0.0
        %649 = vmatpush2.msra.mxu0 0.0
        %650 = vmatprep.mubr.f32.mxu0 0.0
        %651 = vmatmul.mubr.f32.gmra.mxu0 %v507
        %v652 = vpop.f32.mrf.mxu0
        %v653 = vadd.f32 0.0, %v652
        %v654 = vpop.f32.mrf.mxu0
        %655 = vdwg.mxu0
        %v656 = vadd.f32 %v418, %v582
        %v657 = vadd.f32 %v420, %v584
        %v658 = vadd.f32 %v489, %v653
        %s659 = scalar_lea.vmem %s1, 24
        %v660 = vld [vmem:[%s659] sm:$0xff]
        %661 = vrot.lane.b32.xlu0 %v169, 110
        %v662 = vpop.permute.xlu0 %661
        %663 = vrot.lane.b32.xlu0 %v176, 110
        %v664 = vpop.permute.xlu0 %663
        %665 = vrot.lane.b32.xlu0 %v170, 110
        %v666 = vpop.permute.xlu0 %665
        %667 = vrot.lane.b32.xlu0 %v177, 110
        %v668 = vpop.permute.xlu0 %667
        %vm669 = vcmask 900096
        %v670 = vsel %vm669, %v662, %v664
        %v671 = vsel %vm669, %v664, %v666
        %v672 = vsel %vm669, %v666, %v668
        %v674 = vsel %vm190, %v660, 0
        %v676 = vsel %vm194, %v670, 0
        %v678 = vsel %vm194, %v671, 0
        %v680 = vsel %vm194, %v672, 0
        %682 = vmatprep.subr.mxu0 0.0
        %683 = vmatpush1.msra.mxu0 0.0
        %684 = vmatprep.subr.mxu0 0.0
        %685 = vmatpush1.msra.mxu0 0.0
        %686 = vmatprep.subr.mxu0 0.0
        %687 = vmatpush1.msra.mxu0 0.0
        %688 = vmatprep.subr.mxu0 0.0
        %689 = vmatpush1.msra.mxu0 0.0
        %690 = vmatprep.subr.mxu0 0.0
        %691 = vmatpush1.msra.mxu0 0.0
        %692 = vmatprep.subr.mxu0 0.0
        %693 = vmatpush1.msra.mxu0 0.0
        %694 = vmatprep.subr.mxu0 0.0
        %695 = vmatpush1.msra.mxu0 0.0
        %696 = vmatprep.subr.mxu0 0.0
        %697 = vmatpush1.msra.mxu0 0.0
        %698 = vmatprep.subr.mxu0 0.0
        %699 = vmatpush1.msra.mxu0 0.0
        %700 = vmatprep.subr.mxu0 0.0
        %701 = vmatpush1.msra.mxu0 0.0
        %702 = vmatprep.subr.mxu0 0.0
        %703 = vmatpush1.msra.mxu0 0.0
        %704 = vmatprep.subr.mxu0 0.0
        %705 = vmatpush1.msra.mxu0 0.0
        %706 = vmatprep.subr.mxu0 0.0
        %707 = vmatpush1.msra.mxu0 0.0
        %708 = vmatprep.subr.mxu0 0.0
        %709 = vmatpush1.msra.mxu0 0.0
        %710 = vmatprep.subr.mxu0 0.0
        %711 = vmatpush1.msra.mxu0 0.0
        %712 = vmatprep.subr.mxu0 %v678
        %713 = vmatpush1.msra.mxu0 %v676
        %714 = vmatprep.subr.mxu0 0.0
        %715 = vmatpush2.msra.mxu0 0.0
        %716 = vmatprep.subr.mxu0 0.0
        %717 = vmatpush2.msra.mxu0 0.0
        %718 = vmatprep.subr.mxu0 0.0
        %719 = vmatpush2.msra.mxu0 0.0
        %720 = vmatprep.subr.mxu0 0.0
        %721 = vmatpush2.msra.mxu0 0.0
        %722 = vmatprep.subr.mxu0 0.0
        %723 = vmatpush2.msra.mxu0 0.0
        %724 = vmatprep.subr.mxu0 0.0
        %725 = vmatpush2.msra.mxu0 0.0
        %726 = vmatprep.subr.mxu0 0.0
        %727 = vmatpush2.msra.mxu0 0.0
        %728 = vmatprep.subr.mxu0 0.0
        %729 = vmatpush2.msra.mxu0 0.0
        %730 = vmatprep.subr.mxu0 0.0
        %731 = vmatpush2.msra.mxu0 0.0
        %732 = vmatprep.subr.mxu0 0.0
        %733 = vmatpush2.msra.mxu0 0.0
        %734 = vmatprep.subr.mxu0 0.0
        %735 = vmatpush2.msra.mxu0 0.0
        %736 = vmatprep.subr.mxu0 0.0
        %737 = vmatpush2.msra.mxu0 0.0
        %738 = vmatprep.subr.mxu0 0.0
        %739 = vmatpush2.msra.mxu0 0.0
        %740 = vmatprep.subr.mxu0 0.0
        %741 = vmatpush2.msra.mxu0 0.0
        %742 = vmatprep.subr.mxu0 0.0
        %743 = vmatpush2.msra.mxu0 0.0
        %744 = vmatprep.subr.mxu0 0.0
        %745 = vmatpush2.msra.mxu0 0.0
        %746 = vmatprep.mubr.f32.mxu0 0.0
        %747 = vmatmul.mubr.f32.gmra.mxu0 %v674
        %v748 = vpop.f32.mrf.mxu0
        %v749 = vadd.f32 0.0, %v748
        %v750 = vpop.f32.mrf.mxu0
        %v751 = vadd.f32 0.0, %v750
        %752 = vdwg.mxu0
        %753 = vmatprep.subr.mxu0 0.0
        %754 = vmatpush1.msra.mxu0 0.0
        %755 = vmatprep.subr.mxu0 0.0
        %756 = vmatpush1.msra.mxu0 0.0
        %757 = vmatprep.subr.mxu0 0.0
        %758 = vmatpush1.msra.mxu0 0.0
        %759 = vmatprep.subr.mxu0 0.0
        %760 = vmatpush1.msra.mxu0 0.0
        %761 = vmatprep.subr.mxu0 0.0
        %762 = vmatpush1.msra.mxu0 0.0
        %763 = vmatprep.subr.mxu0 0.0
        %764 = vmatpush1.msra.mxu0 0.0
        %765 = vmatprep.subr.mxu0 0.0
        %766 = vmatpush1.msra.mxu0 0.0
        %767 = vmatprep.subr.mxu0 0.0
        %768 = vmatpush1.msra.mxu0 0.0
        %769 = vmatprep.subr.mxu0 0.0
        %770 = vmatpush1.msra.mxu0 0.0
        %771 = vmatprep.subr.mxu0 0.0
        %772 = vmatpush1.msra.mxu0 0.0
        %773 = vmatprep.subr.mxu0 0.0
        %774 = vmatpush1.msra.mxu0 0.0
        %775 = vmatprep.subr.mxu0 0.0
        %776 = vmatpush1.msra.mxu0 0.0
        %777 = vmatprep.subr.mxu0 0.0
        %778 = vmatpush1.msra.mxu0 0.0
        %779 = vmatprep.subr.mxu0 0.0
        %780 = vmatpush1.msra.mxu0 0.0
        %781 = vmatprep.subr.mxu0 0.0
        %782 = vmatpush1.msra.mxu0 0.0
        %783 = vmatprep.subr.mxu0 0.0
        %784 = vmatpush1.msra.mxu0 %v680
        %785 = vmatprep.subr.mxu0 0.0
        %786 = vmatpush2.msra.mxu0 0.0
        %787 = vmatprep.subr.mxu0 0.0
        %788 = vmatpush2.msra.mxu0 0.0
        %789 = vmatprep.subr.mxu0 0.0
        %790 = vmatpush2.msra.mxu0 0.0
        %791 = vmatprep.subr.mxu0 0.0
        %792 = vmatpush2.msra.mxu0 0.0
        %793 = vmatprep.subr.mxu0 0.0
        %794 = vmatpush2.msra.mxu0 0.0
        %795 = vmatprep.subr.mxu0 0.0
        %796 = vmatpush2.msra.mxu0 0.0
        %797 = vmatprep.subr.mxu0 0.0
        %798 = vmatpush2.msra.mxu0 0.0
        %799 = vmatprep.subr.mxu0 0.0
        %800 = vmatpush2.msra.mxu0 0.0
        %801 = vmatprep.subr.mxu0 0.0
        %802 = vmatpush2.msra.mxu0 0.0
        %803 = vmatprep.subr.mxu0 0.0
        %804 = vmatpush2.msra.mxu0 0.0
        %805 = vmatprep.subr.mxu0 0.0
        %806 = vmatpush2.msra.mxu0 0.0
        %807 = vmatprep.subr.mxu0 0.0
        %808 = vmatpush2.msra.mxu0 0.0
        %809 = vmatprep.subr.mxu0 0.0
        %810 = vmatpush2.msra.mxu0 0.0
        %811 = vmatprep.subr.mxu0 0.0
        %812 = vmatpush2.msra.mxu0 0.0
        %813 = vmatprep.subr.mxu0 0.0
        %814 = vmatpush2.msra.mxu0 0.0
        %815 = vmatprep.subr.mxu0 0.0
        %816 = vmatpush2.msra.mxu0 0.0
        %817 = vmatprep.mubr.f32.mxu0 0.0
        %818 = vmatmul.mubr.f32.gmra.mxu0 %v674
        %v819 = vpop.f32.mrf.mxu0
        %v820 = vadd.f32 0.0, %v819
        %v821 = vpop.f32.mrf.mxu0
        %822 = vdwg.mxu0
        %v823 = vadd.f32 %v656, %v749
        %v824 = vadd.f32 %v657, %v751
        %v825 = vadd.f32 %v658, %v820
        %s826 = scalar_lea.vmem %s1, 32
        %v827 = vld [vmem:[%s826] sm:$0xff]
        %828 = vrot.lane.b32.xlu0 %v169, 109
        %v829 = vpop.permute.xlu0 %828
        %830 = vrot.lane.b32.xlu0 %v176, 109
        %v831 = vpop.permute.xlu0 %830
        %832 = vrot.lane.b32.xlu0 %v170, 109
        %v833 = vpop.permute.xlu0 %832
        %834 = vrot.lane.b32.xlu0 %v177, 109
        %v835 = vpop.permute.xlu0 %834
        %vm836 = vcmask 891904
        %v837 = vsel %vm836, %v829, %v831
        %v838 = vsel %vm836, %v831, %v833
        %v839 = vsel %vm836, %v833, %v835
        %v841 = vsel %vm190, %v827, 0
        %v843 = vsel %vm194, %v837, 0
        %v845 = vsel %vm194, %v838, 0
        %v847 = vsel %vm194, %v839, 0
        %849 = vmatprep.subr.mxu0 0.0
        %850 = vmatpush1.msra.mxu0 0.0
        %851 = vmatprep.subr.mxu0 0.0
        %852 = vmatpush1.msra.mxu0 0.0
        %853 = vmatprep.subr.mxu0 0.0
        %854 = vmatpush1.msra.mxu0 0.0
        %855 = vmatprep.subr.mxu0 0.0
        %856 = vmatpush1.msra.mxu0 0.0
        %857 = vmatprep.subr.mxu0 0.0
        %858 = vmatpush1.msra.mxu0 0.0
        %859 = vmatprep.subr.mxu0 0.0
        %860 = vmatpush1.msra.mxu0 0.0
        %861 = vmatprep.subr.mxu0 0.0
        %862 = vmatpush1.msra.mxu0 0.0
        %863 = vmatprep.subr.mxu0 0.0
        %864 = vmatpush1.msra.mxu0 0.0
        %865 = vmatprep.subr.mxu0 0.0
        %866 = vmatpush1.msra.mxu0 0.0
        %867 = vmatprep.subr.mxu0 0.0
        %868 = vmatpush1.msra.mxu0 0.0
        %869 = vmatprep.subr.mxu0 0.0
        %870 = vmatpush1.msra.mxu0 0.0
        %871 = vmatprep.subr.mxu0 0.0
        %872 = vmatpush1.msra.mxu0 0.0
        %873 = vmatprep.subr.mxu0 0.0
        %874 = vmatpush1.msra.mxu0 0.0
        %875 = vmatprep.subr.mxu0 0.0
        %876 = vmatpush1.msra.mxu0 0.0
        %877 = vmatprep.subr.mxu0 0.0
        %878 = vmatpush1.msra.mxu0 0.0
        %879 = vmatprep.subr.mxu0 %v845
        %880 = vmatpush1.msra.mxu0 %v843
        %881 = vmatprep.subr.mxu0 0.0
        %882 = vmatpush2.msra.mxu0 0.0
        %883 = vmatprep.subr.mxu0 0.0
        %884 = vmatpush2.msra.mxu0 0.0
        %885 = vmatprep.subr.mxu0 0.0
        %886 = vmatpush2.msra.mxu0 0.0
        %887 = vmatprep.subr.mxu0 0.0
        %888 = vmatpush2.msra.mxu0 0.0
        %889 = vmatprep.subr.mxu0 0.0
        %890 = vmatpush2.msra.mxu0 0.0
        %891 = vmatprep.subr.mxu0 0.0
        %892 = vmatpush2.msra.mxu0 0.0
        %893 = vmatprep.subr.mxu0 0.0
        %894 = vmatpush2.msra.mxu0 0.0
        %895 = vmatprep.subr.mxu0 0.0
        %896 = vmatpush2.msra.mxu0 0.0
        %897 = vmatprep.subr.mxu0 0.0
        %898 = vmatpush2.msra.mxu0 0.0
        %899 = vmatprep.subr.mxu0 0.0
        %900 = vmatpush2.msra.mxu0 0.0
        %901 = vmatprep.subr.mxu0 0.0
        %902 = vmatpush2.msra.mxu0 0.0
        %903 = vmatprep.subr.mxu0 0.0
        %904 = vmatpush2.msra.mxu0 0.0
        %905 = vmatprep.subr.mxu0 0.0
        %906 = vmatpush2.msra.mxu0 0.0
        %907 = vmatprep.subr.mxu0 0.0
        %908 = vmatpush2.msra.mxu0 0.0
        %909 = vmatprep.subr.mxu0 0.0
        %910 = vmatpush2.msra.mxu0 0.0
        %911 = vmatprep.subr.mxu0 0.0
        %912 = vmatpush2.msra.mxu0 0.0
        %913 = vmatprep.mubr.f32.mxu0 0.0
        %914 = vmatmul.mubr.f32.gmra.mxu0 %v841
        %v915 = vpop.f32.mrf.mxu0
        %v916 = vadd.f32 0.0, %v915
        %v917 = vpop.f32.mrf.mxu0
        %v918 = vadd.f32 0.0, %v917
        %919 = vdwg.mxu0
        %920 = vmatprep.subr.mxu0 0.0
        %921 = vmatpush1.msra.mxu0 0.0
        %922 = vmatprep.subr.mxu0 0.0
        %923 = vmatpush1.msra.mxu0 0.0
        %924 = vmatprep.subr.mxu0 0.0
        %925 = vmatpush1.msra.mxu0 0.0
        %926 = vmatprep.subr.mxu0 0.0
        %927 = vmatpush1.msra.mxu0 0.0
        %928 = vmatprep.subr.mxu0 0.0
        %929 = vmatpush1.msra.mxu0 0.0
        %930 = vmatprep.subr.mxu0 0.0
        %931 = vmatpush1.msra.mxu0 0.0
        %932 = vmatprep.subr.mxu0 0.0
        %933 = vmatpush1.msra.mxu0 0.0
        %934 = vmatprep.subr.mxu0 0.0
        %935 = vmatpush1.msra.mxu0 0.0
        %936 = vmatprep.subr.mxu0 0.0
        %937 = vmatpush1.msra.mxu0 0.0
        %938 = vmatprep.subr.mxu0 0.0
        %939 = vmatpush1.msra.mxu0 0.0
        %940 = vmatprep.subr.mxu0 0.0
        %941 = vmatpush1.msra.mxu0 0.0
        %942 = vmatprep.subr.mxu0 0.0
        %943 = vmatpush1.msra.mxu0 0.0
        %944 = vmatprep.subr.mxu0 0.0
        %945 = vmatpush1.msra.mxu0 0.0
        %946 = vmatprep.subr.mxu0 0.0
        %947 = vmatpush1.msra.mxu0 0.0
        %948 = vmatprep.subr.mxu0 0.0
        %949 = vmatpush1.msra.mxu0 0.0
        %950 = vmatprep.subr.mxu0 0.0
        %951 = vmatpush1.msra.mxu0 %v847
        %952 = vmatprep.subr.mxu0 0.0
        %953 = vmatpush2.msra.mxu0 0.0
        %954 = vmatprep.subr.mxu0 0.0
        %955 = vmatpush2.msra.mxu0 0.0
        %956 = vmatprep.subr.mxu0 0.0
        %957 = vmatpush2.msra.mxu0 0.0
        %958 = vmatprep.subr.mxu0 0.0
        %959 = vmatpush2.msra.mxu0 0.0
        %960 = vmatprep.subr.mxu0 0.0
        %961 = vmatpush2.msra.mxu0 0.0
        %962 = vmatprep.subr.mxu0 0.0
        %963 = vmatpush2.msra.mxu0 0.0
        %964 = vmatprep.subr.mxu0 0.0
        %965 = vmatpush2.msra.mxu0 0.0
        %966 = vmatprep.subr.mxu0 0.0
        %967 = vmatpush2.msra.mxu0 0.0
        %968 = vmatprep.subr.mxu0 0.0
        %969 = vmatpush2.msra.mxu0 0.0
        %970 = vmatprep.subr.mxu0 0.0
        %971 = vmatpush2.msra.mxu0 0.0
        %972 = vmatprep.subr.mxu0 0.0
        %973 = vmatpush2.msra.mxu0 0.0
        %974 = vmatprep.subr.mxu0 0.0
        %975 = vmatpush2.msra.mxu0 0.0
        %976 = vmatprep.subr.mxu0 0.0
        %977 = vmatpush2.msra.mxu0 0.0
        %978 = vmatprep.subr.mxu0 0.0
        %979 = vmatpush2.msra.mxu0 0.0
        %980 = vmatprep.subr.mxu0 0.0
        %981 = vmatpush2.msra.mxu0 0.0
        %982 = vmatprep.subr.mxu0 0.0
        %983 = vmatpush2.msra.mxu0 0.0
        %984 = vmatprep.mubr.f32.mxu0 0.0
        %985 = vmatmul.mubr.f32.gmra.mxu0 %v841
        %v986 = vpop.f32.mrf.mxu0
        %v987 = vadd.f32 0.0, %v986
        %v988 = vpop.f32.mrf.mxu0
        %989 = vdwg.mxu0
        %v990 = vadd.f32 %v823, %v916
        %v991 = vadd.f32 %v824, %v918
        %v992 = vadd.f32 %v825, %v987
        %s993 = scalar_lea.vmem %s1, 40
        %v994 = vld [vmem:[%s993] sm:$0xff]
        %995 = vrot.lane.b32.xlu0 %v169, 108
        %v996 = vpop.permute.xlu0 %995
        %997 = vrot.lane.b32.xlu0 %v176, 108
        %v998 = vpop.permute.xlu0 %997
        %999 = vrot.lane.b32.xlu0 %v170, 108
        %v1000 = vpop.permute.xlu0 %999
        %1001 = vrot.lane.b32.xlu0 %v177, 108
        %v1002 = vpop.permute.xlu0 %1001
        %vm1003 = vcmask 883712
        %v1004 = vsel %vm1003, %v996, %v998
        %v1005 = vsel %vm1003, %v998, %v1000
        %v1006 = vsel %vm1003, %v1000, %v1002
        %v1008 = vsel %vm190, %v994, 0
        %v1010 = vsel %vm194, %v1004, 0
        %v1012 = vsel %vm194, %v1005, 0
        %v1014 = vsel %vm194, %v1006, 0
        %1016 = vmatprep.subr.mxu0 0.0
        %1017 = vmatpush1.msra.mxu0 0.0
        %1018 = vmatprep.subr.mxu0 0.0
        %1019 = vmatpush1.msra.mxu0 0.0
        %1020 = vmatprep.subr.mxu0 0.0
        %1021 = vmatpush1.msra.mxu0 0.0
        %1022 = vmatprep.subr.mxu0 0.0
        %1023 = vmatpush1.msra.mxu0 0.0
        %1024 = vmatprep.subr.mxu0 0.0
        %1025 = vmatpush1.msra.mxu0 0.0
        %1026 = vmatprep.subr.mxu0 0.0
        %1027 = vmatpush1.msra.mxu0 0.0
        %1028 = vmatprep.subr.mxu0 0.0
        %1029 = vmatpush1.msra.mxu0 0.0
        %1030 = vmatprep.subr.mxu0 0.0
        %1031 = vmatpush1.msra.mxu0 0.0
        %1032 = vmatprep.subr.mxu0 0.0
        %1033 = vmatpush1.msra.mxu0 0.0
        %1034 = vmatprep.subr.mxu0 0.0
        %1035 = vmatpush1.msra.mxu0 0.0
        %1036 = vmatprep.subr.mxu0 0.0
        %1037 = vmatpush1.msra.mxu0 0.0
        %1038 = vmatprep.subr.mxu0 0.0
        %1039 = vmatpush1.msra.mxu0 0.0
        %1040 = vmatprep.subr.mxu0 0.0
        %1041 = vmatpush1.msra.mxu0 0.0
        %1042 = vmatprep.subr.mxu0 0.0
        %1043 = vmatpush1.msra.mxu0 0.0
        %1044 = vmatprep.subr.mxu0 0.0
        %1045 = vmatpush1.msra.mxu0 0.0
        %1046 = vmatprep.subr.mxu0 %v1012
        %1047 = vmatpush1.msra.mxu0 %v1010
        %1048 = vmatprep.subr.mxu0 0.0
        %1049 = vmatpush2.msra.mxu0 0.0
        %1050 = vmatprep.subr.mxu0 0.0
        %1051 = vmatpush2.msra.mxu0 0.0
        %1052 = vmatprep.subr.mxu0 0.0
        %1053 = vmatpush2.msra.mxu0 0.0
        %1054 = vmatprep.subr.mxu0 0.0
        %1055 = vmatpush2.msra.mxu0 0.0
        %1056 = vmatprep.subr.mxu0 0.0
        %1057 = vmatpush2.msra.mxu0 0.0
        %1058 = vmatprep.subr.mxu0 0.0
        %1059 = vmatpush2.msra.mxu0 0.0
        %1060 = vmatprep.subr.mxu0 0.0
        %1061 = vmatpush2.msra.mxu0 0.0
        %1062 = vmatprep.subr.mxu0 0.0
        %1063 = vmatpush2.msra.mxu0 0.0
        %1064 = vmatprep.subr.mxu0 0.0
        %1065 = vmatpush2.msra.mxu0 0.0
        %1066 = vmatprep.subr.mxu0 0.0
        %1067 = vmatpush2.msra.mxu0 0.0
        %1068 = vmatprep.subr.mxu0 0.0
        %1069 = vmatpush2.msra.mxu0 0.0
        %1070 = vmatprep.subr.mxu0 0.0
        %1071 = vmatpush2.msra.mxu0 0.0
        %1072 = vmatprep.subr.mxu0 0.0
        %1073 = vmatpush2.msra.mxu0 0.0
        %1074 = vmatprep.subr.mxu0 0.0
        %1075 = vmatpush2.msra.mxu0 0.0
        %1076 = vmatprep.subr.mxu0 0.0
        %1077 = vmatpush2.msra.mxu0 0.0
        %1078 = vmatprep.subr.mxu0 0.0
        %1079 = vmatpush2.msra.mxu0 0.0
        %1080 = vmatprep.mubr.f32.mxu0 0.0
        %1081 = vmatmul.mubr.f32.gmra.mxu0 %v1008
        %v1082 = vpop.f32.mrf.mxu0
        %v1083 = vadd.f32 0.0, %v1082
        %v1084 = vpop.f32.mrf.mxu0
        %v1085 = vadd.f32 0.0, %v1084
        %1086 = vdwg.mxu0
        %1087 = vmatprep.subr.mxu0 0.0
        %1088 = vmatpush1.msra.mxu0 0.0
        %1089 = vmatprep.subr.mxu0 0.0
        %1090 = vmatpush1.msra.mxu0 0.0
        %1091 = vmatprep.subr.mxu0 0.0
        %1092 = vmatpush1.msra.mxu0 0.0
        %1093 = vmatprep.subr.mxu0 0.0
        %1094 = vmatpush1.msra.mxu0 0.0
        %1095 = vmatprep.subr.mxu0 0.0
        %1096 = vmatpush1.msra.mxu0 0.0
        %1097 = vmatprep.subr.mxu0 0.0
        %1098 = vmatpush1.msra.mxu0 0.0
        %1099 = vmatprep.subr.mxu0 0.0
        %1100 = vmatpush1.msra.mxu0 0.0
        %1101 = vmatprep.subr.mxu0 0.0
        %1102 = vmatpush1.msra.mxu0 0.0
        %1103 = vmatprep.subr.mxu0 0.0
        %1104 = vmatpush1.msra.mxu0 0.0
        %1105 = vmatprep.subr.mxu0 0.0
        %1106 = vmatpush1.msra.mxu0 0.0
        %1107 = vmatprep.subr.mxu0 0.0
        %1108 = vmatpush1.msra.mxu0 0.0
        %1109 = vmatprep.subr.mxu0 0.0
        %1110 = vmatpush1.msra.mxu0 0.0
        %1111 = vmatprep.subr.mxu0 0.0
        %1112 = vmatpush1.msra.mxu0 0.0
        %1113 = vmatprep.subr.mxu0 0.0
        %1114 = vmatpush1.msra.mxu0 0.0
        %1115 = vmatprep.subr.mxu0 0.0
        %1116 = vmatpush1.msra.mxu0 0.0
        %1117 = vmatprep.subr.mxu0 0.0
        %1118 = vmatpush1.msra.mxu0 %v1014
        %1119 = vmatprep.subr.mxu0 0.0
        %1120 = vmatpush2.msra.mxu0 0.0
        %1121 = vmatprep.subr.mxu0 0.0
        %1122 = vmatpush2.msra.mxu0 0.0
        %1123 = vmatprep.subr.mxu0 0.0
        %1124 = vmatpush2.msra.mxu0 0.0
        %1125 = vmatprep.subr.mxu0 0.0
        %1126 = vmatpush2.msra.mxu0 0.0
        %1127 = vmatprep.subr.mxu0 0.0
        %1128 = vmatpush2.msra.mxu0 0.0
        %1129 = vmatprep.subr.mxu0 0.0
        %1130 = vmatpush2.msra.mxu0 0.0
        %1131 = vmatprep.subr.mxu0 0.0
        %1132 = vmatpush2.msra.mxu0 0.0
        %1133 = vmatprep.subr.mxu0 0.0
        %1134 = vmatpush2.msra.mxu0 0.0
        %1135 = vmatprep.subr.mxu0 0.0
        %1136 = vmatpush2.msra.mxu0 0.0
        %1137 = vmatprep.subr.mxu0 0.0
        %1138 = vmatpush2.msra.mxu0 0.0
        %1139 = vmatprep.subr.mxu0 0.0
        %1140 = vmatpush2.msra.mxu0 0.0
        %1141 = vmatprep.subr.mxu0 0.0
        %1142 = vmatpush2.msra.mxu0 0.0
        %1143 = vmatprep.subr.mxu0 0.0
        %1144 = vmatpush2.msra.mxu0 0.0
        %1145 = vmatprep.subr.mxu0 0.0
        %1146 = vmatpush2.msra.mxu0 0.0
        %1147 = vmatprep.subr.mxu0 0.0
        %1148 = vmatpush2.msra.mxu0 0.0
        %1149 = vmatprep.subr.mxu0 0.0
        %1150 = vmatpush2.msra.mxu0 0.0
        %1151 = vmatprep.mubr.f32.mxu0 0.0
        %1152 = vmatmul.mubr.f32.gmra.mxu0 %v1008
        %v1153 = vpop.f32.mrf.mxu0
        %v1154 = vadd.f32 0.0, %v1153
        %v1155 = vpop.f32.mrf.mxu0
        %1156 = vdwg.mxu0
        %v1157 = vadd.f32 %v990, %v1083
        %v1158 = vadd.f32 %v991, %v1085
        %v1159 = vadd.f32 %v992, %v1154
        %s1160 = scalar_lea.vmem %s1, 48
        %v1161 = vld [vmem:[%s1160] sm:$0xff]
        %1162 = vrot.lane.b32.xlu0 %v169, 92
        %v1163 = vpop.permute.xlu0 %1162
        %1164 = vrot.lane.b32.xlu0 %v176, 92
        %v1165 = vpop.permute.xlu0 %1164
        %1166 = vrot.lane.b32.xlu0 %v170, 92
        %v1167 = vpop.permute.xlu0 %1166
        %1168 = vrot.lane.b32.xlu0 %v177, 92
        %v1169 = vpop.permute.xlu0 %1168
        %vm1170 = vcmask 752640
        %v1171 = vsel %vm1170, %v1163, %v1165
        %v1172 = vsel %vm1170, %v1165, %v1167
        %v1173 = vsel %vm1170, %v1167, %v1169
        %v1175 = vsel %vm190, %v1161, 0
        %v1177 = vsel %vm194, %v1171, 0
        %v1179 = vsel %vm194, %v1172, 0
        %v1181 = vsel %vm194, %v1173, 0
        %1183 = vmatprep.subr.mxu0 0.0
        %1184 = vmatpush1.msra.mxu0 0.0
        %1185 = vmatprep.subr.mxu0 0.0
        %1186 = vmatpush1.msra.mxu0 0.0
        %1187 = vmatprep.subr.mxu0 0.0
        %1188 = vmatpush1.msra.mxu0 0.0
        %1189 = vmatprep.subr.mxu0 0.0
        %1190 = vmatpush1.msra.mxu0 0.0
        %1191 = vmatprep.subr.mxu0 0.0
        %1192 = vmatpush1.msra.mxu0 0.0
        %1193 = vmatprep.subr.mxu0 0.0
        %1194 = vmatpush1.msra.mxu0 0.0
        %1195 = vmatprep.subr.mxu0 0.0
        %1196 = vmatpush1.msra.mxu0 0.0
        %1197 = vmatprep.subr.mxu0 0.0
        %1198 = vmatpush1.msra.mxu0 0.0
        %1199 = vmatprep.subr.mxu0 0.0
        %1200 = vmatpush1.msra.mxu0 0.0
        %1201 = vmatprep.subr.mxu0 0.0
        %1202 = vmatpush1.msra.mxu0 0.0
        %1203 = vmatprep.subr.mxu0 0.0
        %1204 = vmatpush1.msra.mxu0 0.0
        %1205 = vmatprep.subr.mxu0 0.0
        %1206 = vmatpush1.msra.mxu0 0.0
        %1207 = vmatprep.subr.mxu0 0.0
        %1208 = vmatpush1.msra.mxu0 0.0
        %1209 = vmatprep.subr.mxu0 0.0
        %1210 = vmatpush1.msra.mxu0 0.0
        %1211 = vmatprep.subr.mxu0 0.0
        %1212 = vmatpush1.msra.mxu0 0.0
        %1213 = vmatprep.subr.mxu0 %v1179
        %1214 = vmatpush1.msra.mxu0 %v1177
        %1215 = vmatprep.subr.mxu0 0.0
        %1216 = vmatpush2.msra.mxu0 0.0
        %1217 = vmatprep.subr.mxu0 0.0
        %1218 = vmatpush2.msra.mxu0 0.0
        %1219 = vmatprep.subr.mxu0 0.0
        %1220 = vmatpush2.msra.mxu0 0.0
        %1221 = vmatprep.subr.mxu0 0.0
        %1222 = vmatpush2.msra.mxu0 0.0
        %1223 = vmatprep.subr.mxu0 0.0
        %1224 = vmatpush2.msra.mxu0 0.0
        %1225 = vmatprep.subr.mxu0 0.0
        %1226 = vmatpush2.msra.mxu0 0.0
        %1227 = vmatprep.subr.mxu0 0.0
        %1228 = vmatpush2.msra.mxu0 0.0
        %1229 = vmatprep.subr.mxu0 0.0
        %1230 = vmatpush2.msra.mxu0 0.0
        %1231 = vmatprep.subr.mxu0 0.0
        %1232 = vmatpush2.msra.mxu0 0.0
        %1233 = vmatprep.subr.mxu0 0.0
        %1234 = vmatpush2.msra.mxu0 0.0
        %1235 = vmatprep.subr.mxu0 0.0
        %1236 = vmatpush2.msra.mxu0 0.0
        %1237 = vmatprep.subr.mxu0 0.0
        %1238 = vmatpush2.msra.mxu0 0.0
        %1239 = vmatprep.subr.mxu0 0.0
        %1240 = vmatpush2.msra.mxu0 0.0
        %1241 = vmatprep.subr.mxu0 0.0
        %1242 = vmatpush2.msra.mxu0 0.0
        %1243 = vmatprep.subr.mxu0 0.0
        %1244 = vmatpush2.msra.mxu0 0.0
        %1245 = vmatprep.subr.mxu0 0.0
        %1246 = vmatpush2.msra.mxu0 0.0
        %1247 = vmatprep.mubr.f32.mxu0 0.0
        %1248 = vmatmul.mubr.f32.gmra.mxu0 %v1175
        %v1249 = vpop.f32.mrf.mxu0
        %v1250 = vadd.f32 0.0, %v1249
        %v1251 = vpop.f32.mrf.mxu0
        %v1252 = vadd.f32 0.0, %v1251
        %1253 = vdwg.mxu0
        %1254 = vmatprep.subr.mxu0 0.0
        %1255 = vmatpush1.msra.mxu0 0.0
        %1256 = vmatprep.subr.mxu0 0.0
        %1257 = vmatpush1.msra.mxu0 0.0
        %1258 = vmatprep.subr.mxu0 0.0
        %1259 = vmatpush1.msra.mxu0 0.0
        %1260 = vmatprep.subr.mxu0 0.0
        %1261 = vmatpush1.msra.mxu0 0.0
        %1262 = vmatprep.subr.mxu0 0.0
        %1263 = vmatpush1.msra.mxu0 0.0
        %1264 = vmatprep.subr.mxu0 0.0
        %1265 = vmatpush1.msra.mxu0 0.0
        %1266 = vmatprep.subr.mxu0 0.0
        %1267 = vmatpush1.msra.mxu0 0.0
        %1268 = vmatprep.subr.mxu0 0.0
        %1269 = vmatpush1.msra.mxu0 0.0
        %1270 = vmatprep.subr.mxu0 0.0
        %1271 = vmatpush1.msra.mxu0 0.0
        %1272 = vmatprep.subr.mxu0 0.0
        %1273 = vmatpush1.msra.mxu0 0.0
        %1274 = vmatprep.subr.mxu0 0.0
        %1275 = vmatpush1.msra.mxu0 0.0
        %1276 = vmatprep.subr.mxu0 0.0
        %1277 = vmatpush1.msra.mxu0 0.0
        %1278 = vmatprep.subr.mxu0 0.0
        %1279 = vmatpush1.msra.mxu0 0.0
        %1280 = vmatprep.subr.mxu0 0.0
        %1281 = vmatpush1.msra.mxu0 0.0
        %1282 = vmatprep.subr.mxu0 0.0
        %1283 = vmatpush1.msra.mxu0 0.0
        %1284 = vmatprep.subr.mxu0 0.0
        %1285 = vmatpush1.msra.mxu0 %v1181
        %1286 = vmatprep.subr.mxu0 0.0
        %1287 = vmatpush2.msra.mxu0 0.0
        %1288 = vmatprep.subr.mxu0 0.0
        %1289 = vmatpush2.msra.mxu0 0.0
        %1290 = vmatprep.subr.mxu0 0.0
        %1291 = vmatpush2.msra.mxu0 0.0
        %1292 = vmatprep.subr.mxu0 0.0
        %1293 = vmatpush2.msra.mxu0 0.0
        %1294 = vmatprep.subr.mxu0 0.0
        %1295 = vmatpush2.msra.mxu0 0.0
        %1296 = vmatprep.subr.mxu0 0.0
        %1297 = vmatpush2.msra.mxu0 0.0
        %1298 = vmatprep.subr.mxu0 0.0
        %1299 = vmatpush2.msra.mxu0 0.0
        %1300 = vmatprep.subr.mxu0 0.0
        %1301 = vmatpush2.msra.mxu0 0.0
        %1302 = vmatprep.subr.mxu0 0.0
        %1303 = vmatpush2.msra.mxu0 0.0
        %1304 = vmatprep.subr.mxu0 0.0
        %1305 = vmatpush2.msra.mxu0 0.0
        %1306 = vmatprep.subr.mxu0 0.0
        %1307 = vmatpush2.msra.mxu0 0.0
        %1308 = vmatprep.subr.mxu0 0.0
        %1309 = vmatpush2.msra.mxu0 0.0
        %1310 = vmatprep.subr.mxu0 0.0
        %1311 = vmatpush2.msra.mxu0 0.0
        %1312 = vmatprep.subr.mxu0 0.0
        %1313 = vmatpush2.msra.mxu0 0.0
        %1314 = vmatprep.subr.mxu0 0.0
        %1315 = vmatpush2.msra.mxu0 0.0
        %1316 = vmatprep.subr.mxu0 0.0
        %1317 = vmatpush2.msra.mxu0 0.0
        %1318 = vmatprep.mubr.f32.mxu0 0.0
        %1319 = vmatmul.mubr.f32.gmra.mxu0 %v1175
        %v1320 = vpop.f32.mrf.mxu0
        %v1321 = vadd.f32 0.0, %v1320
        %v1322 = vpop.f32.mrf.mxu0
        %1323 = vdwg.mxu0
        %v1324 = vadd.f32 %v1157, %v1250
        %v1325 = vadd.f32 %v1158, %v1252
        %v1326 = vadd.f32 %v1159, %v1321
        %s1327 = scalar_lea.vmem %s1, 56
        %v1328 = vld [vmem:[%s1327] sm:$0xff]
        %1329 = vrot.lane.b32.xlu0 %v169, 91
        %v1330 = vpop.permute.xlu0 %1329
        %1331 = vrot.lane.b32.xlu0 %v176, 91
        %v1332 = vpop.permute.xlu0 %1331
        %1333 = vrot.lane.b32.xlu0 %v170, 91
        %v1334 = vpop.permute.xlu0 %1333
        %1335 = vrot.lane.b32.xlu0 %v177, 91
        %v1336 = vpop.permute.xlu0 %1335
        %vm1337 = vcmask 744448
        %v1338 = vsel %vm1337, %v1330, %v1332
        %v1339 = vsel %vm1337, %v1332, %v1334
        %v1340 = vsel %vm1337, %v1334, %v1336
        %v1342 = vsel %vm190, %v1328, 0
        %v1344 = vsel %vm194, %v1338, 0
        %v1346 = vsel %vm194, %v1339, 0
        %v1348 = vsel %vm194, %v1340, 0
        %1350 = vmatprep.subr.mxu0 0.0
        %1351 = vmatpush1.msra.mxu0 0.0
        %1352 = vmatprep.subr.mxu0 0.0
        %1353 = vmatpush1.msra.mxu0 0.0
        %1354 = vmatprep.subr.mxu0 0.0
        %1355 = vmatpush1.msra.mxu0 0.0
        %1356 = vmatprep.subr.mxu0 0.0
        %1357 = vmatpush1.msra.mxu0 0.0
        %1358 = vmatprep.subr.mxu0 0.0
        %1359 = vmatpush1.msra.mxu0 0.0
        %1360 = vmatprep.subr.mxu0 0.0
        %1361 = vmatpush1.msra.mxu0 0.0
        %1362 = vmatprep.subr.mxu0 0.0
        %1363 = vmatpush1.msra.mxu0 0.0
        %1364 = vmatprep.subr.mxu0 0.0
        %1365 = vmatpush1.msra.mxu0 0.0
        %1366 = vmatprep.subr.mxu0 0.0
        %1367 = vmatpush1.msra.mxu0 0.0
        %1368 = vmatprep.subr.mxu0 0.0
        %1369 = vmatpush1.msra.mxu0 0.0
        %1370 = vmatprep.subr.mxu0 0.0
        %1371 = vmatpush1.msra.mxu0 0.0
        %1372 = vmatprep.subr.mxu0 0.0
        %1373 = vmatpush1.msra.mxu0 0.0
        %1374 = vmatprep.subr.mxu0 0.0
        %1375 = vmatpush1.msra.mxu0 0.0
        %1376 = vmatprep.subr.mxu0 0.0
        %1377 = vmatpush1.msra.mxu0 0.0
        %1378 = vmatprep.subr.mxu0 0.0
        %1379 = vmatpush1.msra.mxu0 0.0
        %1380 = vmatprep.subr.mxu0 %v1346
        %1381 = vmatpush1.msra.mxu0 %v1344
        %1382 = vmatprep.subr.mxu0 0.0
        %1383 = vmatpush2.msra.mxu0 0.0
        %1384 = vmatprep.subr.mxu0 0.0
        %1385 = vmatpush2.msra.mxu0 0.0
        %1386 = vmatprep.subr.mxu0 0.0
        %1387 = vmatpush2.msra.mxu0 0.0
        %1388 = vmatprep.subr.mxu0 0.0
        %1389 = vmatpush2.msra.mxu0 0.0
        %1390 = vmatprep.subr.mxu0 0.0
        %1391 = vmatpush2.msra.mxu0 0.0
        %1392 = vmatprep.subr.mxu0 0.0
        %1393 = vmatpush2.msra.mxu0 0.0
        %1394 = vmatprep.subr.mxu0 0.0
        %1395 = vmatpush2.msra.mxu0 0.0
        %1396 = vmatprep.subr.mxu0 0.0
        %1397 = vmatpush2.msra.mxu0 0.0
        %1398 = vmatprep.subr.mxu0 0.0
        %1399 = vmatpush2.msra.mxu0 0.0
        %1400 = vmatprep.subr.mxu0 0.0
        %1401 = vmatpush2.msra.mxu0 0.0
        %1402 = vmatprep.subr.mxu0 0.0
        %1403 = vmatpush2.msra.mxu0 0.0
        %1404 = vmatprep.subr.mxu0 0.0
        %1405 = vmatpush2.msra.mxu0 0.0
        %1406 = vmatprep.subr.mxu0 0.0
        %1407 = vmatpush2.msra.mxu0 0.0
        %1408 = vmatprep.subr.mxu0 0.0
        %1409 = vmatpush2.msra.mxu0 0.0
        %1410 = vmatprep.subr.mxu0 0.0
        %1411 = vmatpush2.msra.mxu0 0.0
        %1412 = vmatprep.subr.mxu0 0.0
        %1413 = vmatpush2.msra.mxu0 0.0
        %1414 = vmatprep.mubr.f32.mxu0 0.0
        %1415 = vmatmul.mubr.f32.gmra.mxu0 %v1342
        %v1416 = vpop.f32.mrf.mxu0
        %v1417 = vadd.f32 0.0, %v1416
        %v1418 = vpop.f32.mrf.mxu0
        %v1419 = vadd.f32 0.0, %v1418
        %1420 = vdwg.mxu0
        %1421 = vmatprep.subr.mxu0 0.0
        %1422 = vmatpush1.msra.mxu0 0.0
        %1423 = vmatprep.subr.mxu0 0.0
        %1424 = vmatpush1.msra.mxu0 0.0
        %1425 = vmatprep.subr.mxu0 0.0
        %1426 = vmatpush1.msra.mxu0 0.0
        %1427 = vmatprep.subr.mxu0 0.0
        %1428 = vmatpush1.msra.mxu0 0.0
        %1429 = vmatprep.subr.mxu0 0.0
        %1430 = vmatpush1.msra.mxu0 0.0
        %1431 = vmatprep.subr.mxu0 0.0
        %1432 = vmatpush1.msra.mxu0 0.0
        %1433 = vmatprep.subr.mxu0 0.0
        %1434 = vmatpush1.msra.mxu0 0.0
        %1435 = vmatprep.subr.mxu0 0.0
        %1436 = vmatpush1.msra.mxu0 0.0
        %1437 = vmatprep.subr.mxu0 0.0
        %1438 = vmatpush1.msra.mxu0 0.0
        %1439 = vmatprep.subr.mxu0 0.0
        %1440 = vmatpush1.msra.mxu0 0.0
        %1441 = vmatprep.subr.mxu0 0.0
        %1442 = vmatpush1.msra.mxu0 0.0
        %1443 = vmatprep.subr.mxu0 0.0
        %1444 = vmatpush1.msra.mxu0 0.0
        %1445 = vmatprep.subr.mxu0 0.0
        %1446 = vmatpush1.msra.mxu0 0.0
        %1447 = vmatprep.subr.mxu0 0.0
        %1448 = vmatpush1.msra.mxu0 0.0
        %1449 = vmatprep.subr.mxu0 0.0
        %1450 = vmatpush1.msra.mxu0 0.0
        %1451 = vmatprep.subr.mxu0 0.0
        %1452 = vmatpush1.msra.mxu0 %v1348
        %1453 = vmatprep.subr.mxu0 0.0
        %1454 = vmatpush2.msra.mxu0 0.0
        %1455 = vmatprep.subr.mxu0 0.0
        %1456 = vmatpush2.msra.mxu0 0.0
        %1457 = vmatprep.subr.mxu0 0.0
        %1458 = vmatpush2.msra.mxu0 0.0
        %1459 = vmatprep.subr.mxu0 0.0
        %1460 = vmatpush2.msra.mxu0 0.0
        %1461 = vmatprep.subr.mxu0 0.0
        %1462 = vmatpush2.msra.mxu0 0.0
        %1463 = vmatprep.subr.mxu0 0.0
        %1464 = vmatpush2.msra.mxu0 0.0
        %1465 = vmatprep.subr.mxu0 0.0
        %1466 = vmatpush2.msra.mxu0 0.0
        %1467 = vmatprep.subr.mxu0 0.0
        %1468 = vmatpush2.msra.mxu0 0.0
        %1469 = vmatprep.subr.mxu0 0.0
        %1470 = vmatpush2.msra.mxu0 0.0
        %1471 = vmatprep.subr.mxu0 0.0
        %1472 = vmatpush2.msra.mxu0 0.0
        %1473 = vmatprep.subr.mxu0 0.0
        %1474 = vmatpush2.msra.mxu0 0.0
        %1475 = vmatprep.subr.mxu0 0.0
        %1476 = vmatpush2.msra.mxu0 0.0
        %1477 = vmatprep.subr.mxu0 0.0
        %1478 = vmatpush2.msra.mxu0 0.0
        %1479 = vmatprep.subr.mxu0 0.0
        %1480 = vmatpush2.msra.mxu0 0.0
        %1481 = vmatprep.subr.mxu0 0.0
        %1482 = vmatpush2.msra.mxu0 0.0
        %1483 = vmatprep.subr.mxu0 0.0
        %1484 = vmatpush2.msra.mxu0 0.0
        %1485 = vmatprep.mubr.f32.mxu0 0.0
        %1486 = vmatmul.mubr.f32.gmra.mxu0 %v1342
        %v1487 = vpop.f32.mrf.mxu0
        %v1488 = vadd.f32 0.0, %v1487
        %v1489 = vpop.f32.mrf.mxu0
        %1490 = vdwg.mxu0
        %v1491 = vadd.f32 %v1324, %v1417
        %v1492 = vadd.f32 %v1325, %v1419
        %v1493 = vadd.f32 %v1326, %v1488
        %s1494 = scalar_lea.vmem %s1, 64
        %v1495 = vld [vmem:[%s1494] sm:$0xff]
        %1496 = vrot.lane.b32.xlu0 %v169, 90
        %v1497 = vpop.permute.xlu0 %1496
        %1498 = vrot.lane.b32.xlu0 %v176, 90
        %v1499 = vpop.permute.xlu0 %1498
        %1500 = vrot.lane.b32.xlu0 %v170, 90
        %v1501 = vpop.permute.xlu0 %1500
        %1502 = vrot.lane.b32.xlu0 %v177, 90
        %v1503 = vpop.permute.xlu0 %1502
        %vm1504 = vcmask 736256
        %v1505 = vsel %vm1504, %v1497, %v1499
        %v1506 = vsel %vm1504, %v1499, %v1501
        %v1507 = vsel %vm1504, %v1501, %v1503
        %v1509 = vsel %vm190, %v1495, 0
        %v1511 = vsel %vm194, %v1505, 0
        %v1513 = vsel %vm194, %v1506, 0
        %v1515 = vsel %vm194, %v1507, 0
        %1517 = vmatprep.subr.mxu0 0.0
        %1518 = vmatpush1.msra.mxu0 0.0
        %1519 = vmatprep.subr.mxu0 0.0
        %1520 = vmatpush1.msra.mxu0 0.0
        %1521 = vmatprep.subr.mxu0 0.0
        %1522 = vmatpush1.msra.mxu0 0.0
        %1523 = vmatprep.subr.mxu0 0.0
        %1524 = vmatpush1.msra.mxu0 0.0
        %1525 = vmatprep.subr.mxu0 0.0
        %1526 = vmatpush1.msra.mxu0 0.0
        %1527 = vmatprep.subr.mxu0 0.0
        %1528 = vmatpush1.msra.mxu0 0.0
        %1529 = vmatprep.subr.mxu0 0.0
        %1530 = vmatpush1.msra.mxu0 0.0
        %1531 = vmatprep.subr.mxu0 0.0
        %1532 = vmatpush1.msra.mxu0 0.0
        %1533 = vmatprep.subr.mxu0 0.0
        %1534 = vmatpush1.msra.mxu0 0.0
        %1535 = vmatprep.subr.mxu0 0.0
        %1536 = vmatpush1.msra.mxu0 0.0
        %1537 = vmatprep.subr.mxu0 0.0
        %1538 = vmatpush1.msra.mxu0 0.0
        %1539 = vmatprep.subr.mxu0 0.0
        %1540 = vmatpush1.msra.mxu0 0.0
        %1541 = vmatprep.subr.mxu0 0.0
        %1542 = vmatpush1.msra.mxu0 0.0
        %1543 = vmatprep.subr.mxu0 0.0
        %1544 = vmatpush1.msra.mxu0 0.0
        %1545 = vmatprep.subr.mxu0 0.0
        %1546 = vmatpush1.msra.mxu0 0.0
        %1547 = vmatprep.subr.mxu0 %v1513
        %1548 = vmatpush1.msra.mxu0 %v1511
        %1549 = vmatprep.subr.mxu0 0.0
        %1550 = vmatpush2.msra.mxu0 0.0
        %1551 = vmatprep.subr.mxu0 0.0
        %1552 = vmatpush2.msra.mxu0 0.0
        %1553 = vmatprep.subr.mxu0 0.0
        %1554 = vmatpush2.msra.mxu0 0.0
        %1555 = vmatprep.subr.mxu0 0.0
        %1556 = vmatpush2.msra.mxu0 0.0
        %1557 = vmatprep.subr.mxu0 0.0
        %1558 = vmatpush2.msra.mxu0 0.0
        %1559 = vmatprep.subr.mxu0 0.0
        %1560 = vmatpush2.msra.mxu0 0.0
        %1561 = vmatprep.subr.mxu0 0.0
        %1562 = vmatpush2.msra.mxu0 0.0
        %1563 = vmatprep.subr.mxu0 0.0
        %1564 = vmatpush2.msra.mxu0 0.0
        %1565 = vmatprep.subr.mxu0 0.0
        %1566 = vmatpush2.msra.mxu0 0.0
        %1567 = vmatprep.subr.mxu0 0.0
        %1568 = vmatpush2.msra.mxu0 0.0
        %1569 = vmatprep.subr.mxu0 0.0
        %1570 = vmatpush2.msra.mxu0 0.0
        %1571 = vmatprep.subr.mxu0 0.0
        %1572 = vmatpush2.msra.mxu0 0.0
        %1573 = vmatprep.subr.mxu0 0.0
        %1574 = vmatpush2.msra.mxu0 0.0
        %1575 = vmatprep.subr.mxu0 0.0
        %1576 = vmatpush2.msra.mxu0 0.0
        %1577 = vmatprep.subr.mxu0 0.0
        %1578 = vmatpush2.msra.mxu0 0.0
        %1579 = vmatprep.subr.mxu0 0.0
        %1580 = vmatpush2.msra.mxu0 0.0
        %1581 = vmatprep.mubr.f32.mxu0 0.0
        %1582 = vmatmul.mubr.f32.gmra.mxu0 %v1509
        %v1583 = vpop.f32.mrf.mxu0
        %v1584 = vadd.f32 0.0, %v1583
        %v1585 = vpop.f32.mrf.mxu0
        %v1586 = vadd.f32 0.0, %v1585
        %1587 = vdwg.mxu0
        %1588 = vmatprep.subr.mxu0 0.0
        %1589 = vmatpush1.msra.mxu0 0.0
        %1590 = vmatprep.subr.mxu0 0.0
        %1591 = vmatpush1.msra.mxu0 0.0
        %1592 = vmatprep.subr.mxu0 0.0
        %1593 = vmatpush1.msra.mxu0 0.0
        %1594 = vmatprep.subr.mxu0 0.0
        %1595 = vmatpush1.msra.mxu0 0.0
        %1596 = vmatprep.subr.mxu0 0.0
        %1597 = vmatpush1.msra.mxu0 0.0
        %1598 = vmatprep.subr.mxu0 0.0
        %1599 = vmatpush1.msra.mxu0 0.0
        %1600 = vmatprep.subr.mxu0 0.0
        %1601 = vmatpush1.msra.mxu0 0.0
        %1602 = vmatprep.subr.mxu0 0.0
        %1603 = vmatpush1.msra.mxu0 0.0
        %1604 = vmatprep.subr.mxu0 0.0
        %1605 = vmatpush1.msra.mxu0 0.0
        %1606 = vmatprep.subr.mxu0 0.0
        %1607 = vmatpush1.msra.mxu0 0.0
        %1608 = vmatprep.subr.mxu0 0.0
        %1609 = vmatpush1.msra.mxu0 0.0
        %1610 = vmatprep.subr.mxu0 0.0
        %1611 = vmatpush1.msra.mxu0 0.0
        %1612 = vmatprep.subr.mxu0 0.0
        %1613 = vmatpush1.msra.mxu0 0.0
        %1614 = vmatprep.subr.mxu0 0.0
        %1615 = vmatpush1.msra.mxu0 0.0
        %1616 = vmatprep.subr.mxu0 0.0
        %1617 = vmatpush1.msra.mxu0 0.0
        %1618 = vmatprep.subr.mxu0 0.0
        %1619 = vmatpush1.msra.mxu0 %v1515
        %1620 = vmatprep.subr.mxu0 0.0
        %1621 = vmatpush2.msra.mxu0 0.0
        %1622 = vmatprep.subr.mxu0 0.0
        %1623 = vmatpush2.msra.mxu0 0.0
        %1624 = vmatprep.subr.mxu0 0.0
        %1625 = vmatpush2.msra.mxu0 0.0
        %1626 = vmatprep.subr.mxu0 0.0
        %1627 = vmatpush2.msra.mxu0 0.0
        %1628 = vmatprep.subr.mxu0 0.0
        %1629 = vmatpush2.msra.mxu0 0.0
        %1630 = vmatprep.subr.mxu0 0.0
        %1631 = vmatpush2.msra.mxu0 0.0
        %1632 = vmatprep.subr.mxu0 0.0
        %1633 = vmatpush2.msra.mxu0 0.0
        %1634 = vmatprep.subr.mxu0 0.0
        %1635 = vmatpush2.msra.mxu0 0.0
        %1636 = vmatprep.subr.mxu0 0.0
        %1637 = vmatpush2.msra.mxu0 0.0
        %1638 = vmatprep.subr.mxu0 0.0
        %1639 = vmatpush2.msra.mxu0 0.0
        %1640 = vmatprep.subr.mxu0 0.0
        %1641 = vmatpush2.msra.mxu0 0.0
        %1642 = vmatprep.subr.mxu0 0.0
        %1643 = vmatpush2.msra.mxu0 0.0
        %1644 = vmatprep.subr.mxu0 0.0
        %1645 = vmatpush2.msra.mxu0 0.0
        %1646 = vmatprep.subr.mxu0 0.0
        %1647 = vmatpush2.msra.mxu0 0.0
        %1648 = vmatprep.subr.mxu0 0.0
        %1649 = vmatpush2.msra.mxu0 0.0
        %1650 = vmatprep.subr.mxu0 0.0
        %1651 = vmatpush2.msra.mxu0 0.0
        %1652 = vmatprep.mubr.f32.mxu0 0.0
        %1653 = vmatmul.mubr.f32.gmra.mxu0 %v1509
        %v1654 = vpop.f32.mrf.mxu0
        %v1655 = vadd.f32 0.0, %v1654
        %v1656 = vpop.f32.mrf.mxu0
        %1657 = vdwg.mxu0
        %v1658 = vadd.f32 %v1491, %v1584
        %v1659 = vadd.f32 %v1492, %v1586
        %v1660 = vadd.f32 %v1493, %v1655
        %v1661 = vld [vmem:[%s2] sm:$0xff]
        %1663 = vset.pattern.permute.xlu0 0
        %1664 = vperm.xlu0 %1663, %v1661
        %v1665 = vpop.permute.xlu0 %1664
        %v1667 = vadd.f32 %v1658, %v1665
        %v1668 = vadd.f32 %v1659, %v1665
        %v1669 = vadd.f32 %v1660, %v1665
        %v1670 = vmul.f32 %v1667, 1.442695
        %v1671 = vpow.pop %v1670
        %v1672 = vmul.f32 %v1668, 1.442695
        %v1673 = vpow.pop %v1672
        %v1674 = vmul.f32 %v1669, 1.442695
        %v1675 = vpow.pop %v1674
        %v1676 = vadd.f32 %v1671, 1.0
        %v1677 = vadd.f32 %v1673, 1.0
        %v1678 = vadd.f32 %v1675, 1.0
        %v1679 = vmul.f32 %v1676, %v1676
        %v1680 = vmul.f32 %v1677, %v1677
        %v1681 = vmul.f32 %v1678, %v1678
        %v1682 = vsub.f32 %v1679, 1.0
        %v1683 = vsub.f32 %v1680, 1.0
        %v1684 = vsub.f32 %v1681, 1.0
        %v1685 = vadd.f32 %v1679, 1.0
        %v1686 = vadd.f32 %v1680, 1.0
        %v1687 = vadd.f32 %v1681, 1.0
        %v1688 = vrcp.pop %v1685
        %v1689 = vrcp.pop %v1686
        %v1690 = vrcp.pop %v1687
        %v1691 = vmul.f32 %v1685, %v1688
        %v1692 = vmul.f32 %v1686, %v1689
        %v1693 = vmul.f32 %v1687, %v1690
        %v1694 = vsub.f32 2.0, %v1691
        %v1695 = vsub.f32 2.0, %v1692
        %v1696 = vsub.f32 2.0, %v1693
        %v1697 = vmul.f32 %v1688, %v1694
        %v1698 = vmul.f32 %v1689, %v1695
        %v1699 = vmul.f32 %v1690, %v1696
        %v1700 = vmul.f32 %v1667, %v1682
        %v1701 = vmul.f32 %v1668, %v1683
        %v1702 = vmul.f32 %v1669, %v1684
        %v1703 = vmul.f32 %v1700, %v1697
        %v1704 = vmul.f32 %v1701, %v1698
        %v1705 = vmul.f32 %v1702, %v1699
        %vm1706 = vcmp.gt.f32.partialorder %v1667, 20.0
        %vm1707 = vcmp.gt.f32.partialorder %v1668, 20.0
        %vm1708 = vcmp.gt.f32.partialorder %v1669, 20.0
        %v1709 = vsel %vm1706, %v1667, %v1703
        %v1710 = vsel %vm1707, %v1668, %v1704
        %v1711 = vsel %vm1708, %v1669, %v1705
        %1712 = vst [vmem:[%s163] sm:$0xff] %v1709
        %1713 = vst [vmem:[%s163 + $0x8] sm:$0xff] %v1710
        %1714 = vst [vmem:[%s163 + $0x10] sm:$0xff] %v1711
        %s1715 = sand.u32 %s93, 1
        %s1716 = scalar_lea.sflag [#allocation3], %s1715
        %s1717 = sand.u32 %s93, 1
        %s1718 = smul.addr %s1717, 24
        %s1719 = scalar_lea.vmem [#allocation2], %s1718
        // Predicated region
        $region33: #{tpu_custom_call.1} parent=31 // pred_check
          %p1720 = pneg %p103
        $region34: #{tpu_custom_call.1} parent=31 // pred_check_branch
          %1722 = sbr.rel (%p1720) target = $region36
        $region35: #{tpu_custom_call.1} parent=31 // pred_region
          %s1724 = ssub.s32 384, 384
          %1725 = vsyncadd %s1716, %s1724
          %s1726 = smul.addr %s17, 3
          %s1727 = smul.addr %s1726, 128
          %s1728 = scalar_lea.hbm %s3, %s1727
          %s1730 = sshll.u32 %s1719, 4
          %s1731 = int_to_ptr.vmem [resolvable:$true] %s1730
          %1733 = dma.vmem_to_hbm [thread:$0]  %s1731, 384, %s1728, %s1716
        $region36: #{tpu_custom_call.1} parent=31 // pred_fallthru
          _
      $region32: #{tpu_custom_call.1} parent=5 // pred_fallthru
        _
      %p1734 = scmp.le.s32.totalorder 2, %s12
      // Predicated region
      $region37: #{tpu_custom_call.1} parent=5 // pred_check
        %p1735 = pneg %p1734
      $region38: #{tpu_custom_call.1} parent=5 // pred_check_branch
        %1737 = sbr.rel (%p1735) target = $region40
      $region39: #{tpu_custom_call.1} parent=5 // pred_region
        %s1738 = ssub.s32 %s12, 2
        // Predicated region
        $region41: #{tpu_custom_call.1} parent=39 // pred_check
          %p1739 = pneg %p109
        $region42: #{tpu_custom_call.1} parent=39 // pred_check_branch
          %1741 = sbr.rel (%p1739) target = $region44
        $region43: #{tpu_custom_call.1} parent=39 // pred_region
          %s1742 = sand.u32 %s94, 1
          %s1743 = scalar_lea.sflag [#allocation3], %s1742
          %s1744 = sand.u32 %s94, 1
          %s1745 = smul.addr %s1744, 24
          %s1746 = scalar_lea.vmem [#allocation2], %s1745
          %1747 = dma.done %s1743, 384
        $region44: #{tpu_custom_call.1} parent=39 // pred_fallthru
          _
      $region40: #{tpu_custom_call.1} parent=5 // pred_fallthru
        _
    $region6: #{tpu_custom_call.1} parent=1 // loop_footer
      %s16 = sadd.s32 1, %s12
    $region7: #{tpu_custom_call.1} parent=1 // loop_footer_branch
      %11 = sbr.rel target = $region3
    $region8: #{tpu_custom_call.1} parent=1 // loop_exit
      _
    %1748 = vsyncpa [#allocation3], 1
    %s1749 = scalar_lea.sflag [#allocation3], 1
    %1750 = vsyncpa %s1749, 1

</llo_original>
